<compile_context>
chip_gen: v7x
topology: tpu7x:2x2x1
jax: 0.10.0
libtpu: 0.0.40
codegen_flags: <defaults>
</compile_context>

<pallas_src>
import functools

import jax
import jax.numpy as jnp
from jax.experimental import pallas as pl
from jax.experimental.pallas import tpu as pltpu

KSIZE = 3  # 3x3 conv, padding=1 -> "same" spatial size


def _fcos_head_kernel(x_ref, w_ref, b_ref, bbox_ref, ctr_ref, pad_ref, *,
                      img_w):
    """Fused bbox(4ch) + centerness(1ch) 3x3 'same' conv on a lane-packed plane.

    x_ref   : (1, C_in, P, L) packed input; packed row p holds R = L // img_w
              consecutive image rows (lane-dense, L = R * img_w).
    w_ref   : (5 * C_in * 9,) flattened fused OIHW weights (SMEM scalars).
    b_ref   : (5,) fused bias (SMEM scalars).
    bbox_ref: (1, 4, P, L) packed bbox_head output.
    ctr_ref : (1, 1, P, L) packed centerness_head output.
    pad_ref : (P + 2, L) VMEM scratch: the plane framed by one zero halo packed
              row above/below -> dy = +-1 row taps without any HBM-side pad.
    """
    c_in = x_ref.shape[1]
    p_rows = x_ref.shape[2]
    lanes = x_ref.shape[3]
    rows_per_pack = lanes // img_w
    n_bbox = bbox_ref.shape[1]
    c_out = n_bbox + ctr_ref.shape[1]
    f32 = jnp.float32

    # Boundary masks / selectors, hoisted out of every loop.
    lane_idx = jax.lax.broadcasted_iota(jnp.int32, (p_rows, lanes), 1)
    col = lane_idx % img_w
    left_ok = col > 0                        # reading column w-1 stays in-row
    right_ok = col < (img_w - 1)             # reading column w+1 stays in-row
    first_slot = lane_idx < img_w            # first image row inside a packed row
    last_slot = lane_idx >= (lanes - img_w)  # last image row inside a packed row

    # Zero the halo packed rows once per grid step (the per-channel stores
    # below only touch rows 1..P and never clobber the halo rows).
    pad_ref[...] = jnp.zeros((p_rows + 2, lanes), f32)

    # Accumulators with the bias folded into the init (lane-dense (P, L)).
    acc = [jnp.full((p_rows, lanes), b_ref[co], f32) for co in range(c_out)]

    for ci in range(c_in):
        cur = x_ref[0, ci]                       # (P, L)
        pad_ref[1:p_rows + 1, :] = cur           # frame plane with zero halos
        up = pad_ref[0:p_rows, :]                # packed rows p-1 (row -1 == 0)
        down = pad_ref[2:p_rows + 2, :]          # packed rows p+1 (row P  == 0)

        # dy-shifted planes: x[h-1, w] / x[h, w] / x[h+1, w] at every output
        # position (zero outside the image).  Cross-packed-row pixels arrive
        # via lane rolls (XLU slot, otherwise idle in this kernel).
        if rows_per_pack == 1:
            plane_up, plane_dn = up, down
        else:
            plane_up = jnp.where(first_slot,
                                 pltpu.roll(up, img_w, axis=1),
                                 pltpu.roll(cur, img_w, axis=1))
            plane_dn = jnp.where(last_slot,
                                 pltpu.roll(down, lanes - img_w, axis=1),
                                 pltpu.roll(cur, lanes - img_w, axis=1))

        # 9 taps in (ky, kx) OIHW order; dx = +-1 are lane rolls + edge masks.
        taps = []
        for dy_plane in (plane_up, cur, plane_dn):
            taps.append(jnp.where(left_ok,
                                  pltpu.roll(dy_plane, 1, axis=1), 0.0))
            taps.append(dy_plane)
            taps.append(jnp.where(right_ok,
                                  pltpu.roll(dy_plane, lanes - 1, axis=1), 0.0))

        # Scalar-broadcast FMAs; taps are shared across all 5 output channels.
        # TODO(synk): for production C_in (e.g. 256) replace this with an MXU
        # im2col matmul ((P*L, C_in*9) x (C_in*9, 5 padded to 128)) with the
        # weights in VMEM instead of SMEM scalars.
        for co in range(c_out):
            base = (co * c_in + ci) * KSIZE * KSIZE
            for k in range(KSIZE * KSIZE):
                acc[co] = acc[co] + w_ref[base + k] * taps[k]

    for co in range(n_bbox):
        bbox_ref[0, co] = acc[co].astype(bbox_ref.dtype)
    ctr_ref[0, 0] = acc[n_bbox].astype(ctr_ref.dtype)


def _pick_pack_factor(h, w):
    """Largest R with R*w <= 128 and R | h (every packed row fully populated)."""
    r = max(1, min(128 // max(w, 1), h))
    while h % r != 0:
        r -= 1
    return r


def fcos_head_forward(features_nchw, w_bbox, b_bbox, w_ctr, b_ctr):
    """features_nchw: (N, C_in, H, W) float32 (PyTorch NCHW convention).

    w_bbox: (4, C_in, 3, 3), b_bbox: (4,); w_ctr: (1, C_in, 3, 3), b_ctr: (1,)
    Returns (bbox_reg, centerness) in NCHW: (N, 4, H, W), (N, 1, H, W).
    """
    n, c_in, h, w = features_nchw.shape
    r = _pick_pack_factor(h, w)
    p = h // r
    lanes = r * w

    # Lane-pack R image rows per vreg row: (N, C, H, W) -> (N, C, P, R*W).
    # Row-major contiguous, so this reshape (and the output reshapes below) is
    # a free view -- no HBM pass, unlike the old jnp.pad / output slicing.
    x_packed = features_nchw.reshape(n, c_in, p, lanes)

    # Fuse the two heads' parameters; weights/bias become SMEM scalars.
    w_fused = jnp.concatenate([w_bbox, w_ctr], axis=0)        # (5, C_in, 3, 3)
    c_out = w_fused.shape[0]
    n_bbox = w_bbox.shape[0]
    w_flat = w_fused.reshape(-1).astype(jnp.float32)          # (5*C_in*9,)
    b_fused = jnp.concatenate([b_bbox, b_ctr], axis=0).astype(jnp.float32)

    kernel = functools.partial(_fcos_head_kernel, img_w=w)

    bbox_p, ctr_p = pl.pallas_call(
        kernel,
        out_shape=(
            jax.ShapeDtypeStruct((n, n_bbox, p, lanes), jnp.float32),
            jax.ShapeDtypeStruct((n, c_out - n_bbox, p, lanes), jnp.float32),
        ),
        grid_spec=pltpu.PrefetchScalarGridSpec(
            num_scalar_prefetch=0,
            # One fat grid step per batch element: whole plane per step, so
            # per-step overhead and SMEM weight loads are amortized; both
            # steps are "parallel" so v7x's two TensorCores each take one.
            # TODO(synk): for large FPN maps add a packed-row tile axis with a
            # one-packed-row halo to bound VMEM on v7x (64 MiB).
            grid=(n,),
            in_specs=[
                pl.BlockSpec((1, c_in, p, lanes), lambda i: (i, 0, 0, 0)),
                pl.BlockSpec(memory_space=pltpu.MemorySpace.SMEM),
                pl.BlockSpec(memory_space=pltpu.MemorySpace.SMEM),
            ],
            out_specs=(
                pl.BlockSpec((1, n_bbox, p, lanes), lambda i: (i, 0, 0, 0)),
                pl.BlockSpec((1, c_out - n_bbox, p, lanes),
                             lambda i: (i, 0, 0, 0)),
            ),
            scratch_shapes=[pltpu.VMEM((p + 2, lanes), jnp.float32)],
        ),
        compiler_params=pltpu.CompilerParams(
            dimension_semantics=("parallel",),
            vmem_limit_bytes=64 * 1024 * 1024),
    )(x_packed, w_flat, b_fused)

    bbox_reg = bbox_p.reshape(n, n_bbox, h, w)
    centerness = ctr_p.reshape(n, c_out - n_bbox, h, w)
    return bbox_reg, centerness


def _reference_forward(features_nchw, w_bbox, b_bbox, w_ctr, b_ctr):
    """Pure-JAX reference (lax conv) for correctness checking."""
    dn = jax.lax.conv_dimension_numbers(
        features_nchw.shape, w_bbox.shape, ("NCHW", "OIHW", "NCHW"))
    bbox = jax.lax.conv_general_dilated(
        features_nchw, w_bbox, (1, 1), "SAME", dimension_numbers=dn)
    bbox = bbox + b_bbox[None, :, None, None]
    ctr = jax.lax.conv_general_dilated(
        features_nchw, w_ctr, (1, 1), "SAME", dimension_numbers=dn)
    ctr = ctr + b_ctr[None, :, None, None]
    return bbox, ctr


if __name__ == "__main__":
    N, C_in, H, W = 2, 4, 16, 16

    key = jax.random.PRNGKey(0)
    k_x, k_wb, k_bb, k_wc, k_bc = jax.random.split(key, 5)

    features = jax.random.normal(k_x, (N, C_in, H, W), dtype=jnp.float32)

    # Same parameter shapes as the nn.Conv2d layers in FCOSHead:
    # bbox_head:       Conv2d(C_in, 4, 3, padding=1) -> (4, C_in, 3, 3), (4,)
    # centerness_head: Conv2d(C_in, 1, 3, padding=1) -> (1, C_in, 3, 3), (1,)
    w_bbox = 0.1 * jax.random.normal(k_wb, (4, C_in, 3, 3), dtype=jnp.float32)
    b_bbox = 0.1 * jax.random.normal(k_bb, (4,), dtype=jnp.float32)
    w_ctr = 0.1 * jax.random.normal(k_wc, (1, C_in, 3, 3), dtype=jnp.float32)
    b_ctr = 0.1 * jax.random.normal(k_bc, (1,), dtype=jnp.float32)

    forward = jax.jit(fcos_head_forward)
    bbox_reg, centerness = forward(features, w_bbox, b_bbox, w_ctr, b_ctr)
    jax.block_until_ready((bbox_reg, centerness))

    # Quiet correctness check against a pure-JAX conv reference.
    ref_bbox, ref_ctr = _reference_forward(features, w_bbox, b_bbox,
                                           w_ctr, b_ctr)
    assert bbox_reg.shape == (N, 4, H, W)
    assert centerness.shape == (N, 1, H, W)
    assert jnp.allclose(bbox_reg, ref_bbox, atol=1e-4, rtol=1e-4)
    assert jnp.allclose(centerness, ref_ctr, atol=1e-4, rtol=1e-4)

    print("KERNEL_OK")
</pallas_src>

<mosaic_0001>
module attributes {stable_mosaic.version = 11 : i64} {
  func.func @_fcos_head_kernel(%arg0: i32, %arg1: memref<1x4x2x128xf32, #tpu.memory_space<vmem>>, %arg2: memref<180xf32, #tpu.memory_space<smem>>, %arg3: memref<5xf32, #tpu.memory_space<smem>>, %arg4: memref<1x4x2x128xf32, #tpu.memory_space<vmem>>, %arg5: memref<1x1x2x128xf32, #tpu.memory_space<vmem>>, %arg6: memref<4x128xf32, #tpu.memory_space<vmem>>) attributes {dimension_semantics = [#tpu.dimension_semantics<parallel>], iteration_bounds = array<i64: 2>, scalar_prefetch = 0 : i64, scratch_operands = 1 : i64, tpu.core_type = #tpu.core_type<tc>, window_params = [{transform_indices = @transform_0, window_bounds = array<i64: 1, 4, 2, 128>}, {transform_indices = @transform_1, window_bounds = array<i64: 180>}, {transform_indices = @transform_2, window_bounds = array<i64: 5>}, {transform_indices = @transform_3, window_bounds = array<i64: 1, 4, 2, 128>}, {transform_indices = @transform_4, window_bounds = array<i64: 1, 1, 2, 128>}]} {
    %0 = tpu.iota {dimensions = array<i32: 1>} : vector<2x128xi32>
    %c16_i32 = arith.constant 16 : i32
    %c0_i32 = arith.constant 0 : i32
    %1 = arith.cmpi eq, %c16_i32, %c0_i32 : i32
    %c1_i32 = arith.constant 1 : i32
    %2 = arith.select %1, %c1_i32, %c16_i32 : i32
    %3 = vector.broadcast %2 : i32 to vector<2x128xi32>
    %4 = arith.remsi %0, %3 : vector<2x128xi32>
    %c0_i32_0 = arith.constant 0 : i32
    %5 = vector.broadcast %c0_i32_0 : i32 to vector<2x128xi32>
    %6 = arith.cmpi ne, %4, %5 : vector<2x128xi32>
    %c0_i32_1 = arith.constant 0 : i32
    %7 = vector.broadcast %c0_i32_1 : i32 to vector<2x128xi32>
    %8 = arith.cmpi slt, %4, %7 : vector<2x128xi32>
    %c0_i32_2 = arith.constant 0 : i32
    %9 = arith.cmpi slt, %2, %c0_i32_2 : i32
    %10 = vector.broadcast %9 : i1 to vector<2x128xi1>
    %11 = vector.broadcast %10 : vector<2x128xi1> to vector<2x128xi1>
    %12 = arith.xori %8, %11 : vector<2x128xi1>
    %13 = arith.andi %12, %6 : vector<2x128xi1>
    %14 = vector.broadcast %2 : i32 to vector<2x128xi32>
    %15 = arith.addi %4, %14 : vector<2x128xi32>
    %16 = arith.select %13, %15, %4 : vector<2x128xi1>, vector<2x128xi32>
    %c0_i32_3 = arith.constant 0 : i32
    %17 = vector.broadcast %c0_i32_3 : i32 to vector<2x128xi32>
    %18 = arith.cmpi sgt, %16, %17 : vector<2x128xi32>
    %c15_i32 = arith.constant 15 : i32
    %19 = vector.broadcast %c15_i32 : i32 to vector<2x128xi32>
    %20 = arith.cmpi slt, %16, %19 : vector<2x128xi32>
    %c16_i32_4 = arith.constant 16 : i32
    %21 = vector.broadcast %c16_i32_4 : i32 to vector<2x128xi32>
    %22 = arith.cmpi slt, %0, %21 : vector<2x128xi32>
    %c112_i32 = arith.constant 112 : i32
    %23 = vector.broadcast %c112_i32 : i32 to vector<2x128xi32>
    %24 = arith.cmpi sge, %0, %23 : vector<2x128xi32>
    %cst = arith.constant 0.000000e+00 : f32
    %25 = vector.broadcast %cst : f32 to vector<4x128xf32>
    %c0 = arith.constant 0 : index
    %c0_5 = arith.constant 0 : index
    %26 = vector.load %arg6[%c0, %c0_5] : memref<4x128xf32, #tpu.memory_space<vmem>>, vector<4x128xf32>
    tpu.vector_store %arg6[%c0, %c0_5], %25 {strides = array<i32>} : memref<4x128xf32, #tpu.memory_space<vmem>>, vector<4x128xf32>,
    %c0_6 = arith.constant 0 : index
    %27 = memref.load %arg3[%c0_6] : memref<5xf32, #tpu.memory_space<smem>>
    %28 = vector.broadcast %27 : f32 to vector<2x128xf32>
    %c1 = arith.constant 1 : index
    %29 = memref.load %arg3[%c1] : memref<5xf32, #tpu.memory_space<smem>>
    %30 = vector.broadcast %29 : f32 to vector<2x128xf32>
    %c2 = arith.constant 2 : index
    %31 = memref.load %arg3[%c2] : memref<5xf32, #tpu.memory_space<smem>>
    %32 = vector.broadcast %31 : f32 to vector<2x128xf32>
    %c3 = arith.constant 3 : index
    %33 = memref.load %arg3[%c3] : memref<5xf32, #tpu.memory_space<smem>>
    %34 = vector.broadcast %33 : f32 to vector<2x128xf32>
    %c4 = arith.constant 4 : index
    %35 = memref.load %arg3[%c4] : memref<5xf32, #tpu.memory_space<smem>>
    %36 = vector.broadcast %35 : f32 to vector<2x128xf32>
    %c0_7 = arith.constant 0 : index
    %c0_8 = arith.constant 0 : index
    %c0_9 = arith.constant 0 : index
    %c0_10 = arith.constant 0 : index
    %37 = vector.load %arg1[%c0_7, %c0_8, %c0_9, %c0_10] : memref<1x4x2x128xf32, #tpu.memory_space<vmem>>, vector<1x1x2x128xf32>
    %38 = vector.shape_cast %37 : vector<1x1x2x128xf32> to vector<2x128xf32>
    %c1_11 = arith.constant 1 : index
    %c0_12 = arith.constant 0 : index
    %39 = vector.load %arg6[%c1_11, %c0_12] : memref<4x128xf32, #tpu.memory_space<vmem>>, vector<2x128xf32>
    tpu.vector_store %arg6[%c1_11, %c0_12], %38 {strides = array<i32>} : memref<4x128xf32, #tpu.memory_space<vmem>>, vector<2x128xf32>,
    %c0_13 = arith.constant 0 : index
    %c0_14 = arith.constant 0 : index
    %40 = vector.load %arg6[%c0_13, %c0_14] : memref<4x128xf32, #tpu.memory_space<vmem>>, vector<2x128xf32>
    %c2_15 = arith.constant 2 : index
    %c0_16 = arith.constant 0 : index
    %41 = vector.load %arg6[%c2_15, %c0_16] : memref<4x128xf32, #tpu.memory_space<vmem>>, vector<2x128xf32>
    %c16_i32_17 = arith.constant 16 : i32
    %42 = tpu.dynamic_rotate %40 by %c16_i32_17 dim 1 : vector<2x128xf32>, i32 -> vector<2x128xf32>
    %c16_i32_18 = arith.constant 16 : i32
    %43 = tpu.dynamic_rotate %38 by %c16_i32_18 dim 1 : vector<2x128xf32>, i32 -> vector<2x128xf32>
    %44 = arith.select %22, %42, %43 : vector<2x128xi1>, vector<2x128xf32>
    %c112_i32_19 = arith.constant 112 : i32
    %45 = tpu.dynamic_rotate %41 by %c112_i32_19 dim 1 : vector<2x128xf32>, i32 -> vector<2x128xf32>
    %c112_i32_20 = arith.constant 112 : i32
    %46 = tpu.dynamic_rotate %38 by %c112_i32_20 dim 1 : vector<2x128xf32>, i32 -> vector<2x128xf32>
    %47 = arith.select %24, %45, %46 : vector<2x128xi1>, vector<2x128xf32>
    %c1_i32_21 = arith.constant 1 : i32
    %48 = tpu.dynamic_rotate %44 by %c1_i32_21 dim 1 : vector<2x128xf32>, i32 -> vector<2x128xf32>
    %cst_22 = arith.constant 0.000000e+00 : f32
    %49 = vector.broadcast %cst_22 : f32 to vector<2x128xf32>
    %50 = arith.select %18, %48, %49 : vector<2x128xi1>, vector<2x128xf32>
    %c127_i32 = arith.constant 127 : i32
    %51 = tpu.dynamic_rotate %44 by %c127_i32 dim 1 : vector<2x128xf32>, i32 -> vector<2x128xf32>
    %cst_23 = arith.constant 0.000000e+00 : f32
    %52 = vector.broadcast %cst_23 : f32 to vector<2x128xf32>
    %53 = arith.select %20, %51, %52 : vector<2x128xi1>, vector<2x128xf32>
    %c1_i32_24 = arith.constant 1 : i32
    %54 = tpu.dynamic_rotate %38 by %c1_i32_24 dim 1 : vector<2x128xf32>, i32 -> vector<2x128xf32>
    %cst_25 = arith.constant 0.000000e+00 : f32
    %55 = vector.broadcast %cst_25 : f32 to vector<2x128xf32>
    %56 = arith.select %18, %54, %55 : vector<2x128xi1>, vector<2x128xf32>
    %c127_i32_26 = arith.constant 127 : i32
    %57 = tpu.dynamic_rotate %38 by %c127_i32_26 dim 1 : vector<2x128xf32>, i32 -> vector<2x128xf32>
    %cst_27 = arith.constant 0.000000e+00 : f32
    %58 = vector.broadcast %cst_27 : f32 to vector<2x128xf32>
    %59 = arith.select %20, %57, %58 : vector<2x128xi1>, vector<2x128xf32>
    %c1_i32_28 = arith.constant 1 : i32
    %60 = tpu.dynamic_rotate %47 by %c1_i32_28 dim 1 : vector<2x128xf32>, i32 -> vector<2x128xf32>
    %cst_29 = arith.constant 0.000000e+00 : f32
    %61 = vector.broadcast %cst_29 : f32 to vector<2x128xf32>
    %62 = arith.select %18, %60, %61 : vector<2x128xi1>, vector<2x128xf32>
    %c127_i32_30 = arith.constant 127 : i32
    %63 = tpu.dynamic_rotate %47 by %c127_i32_30 dim 1 : vector<2x128xf32>, i32 -> vector<2x128xf32>
    %cst_31 = arith.constant 0.000000e+00 : f32
    %64 = vector.broadcast %cst_31 : f32 to vector<2x128xf32>
    %65 = arith.select %20, %63, %64 : vector<2x128xi1>, vector<2x128xf32>
    %c0_32 = arith.constant 0 : index
    %66 = memref.load %arg2[%c0_32] : memref<180xf32, #tpu.memory_space<smem>>
    %67 = vector.broadcast %66 : f32 to vector<2x128xf32>
    %68 = arith.mulf %67, %50 : vector<2x128xf32>
    %69 = arith.addf %28, %68 : vector<2x128xf32>
    %c1_33 = arith.constant 1 : index
    %70 = memref.load %arg2[%c1_33] : memref<180xf32, #tpu.memory_space<smem>>
    %71 = vector.broadcast %70 : f32 to vector<2x128xf32>
    %72 = arith.mulf %71, %44 : vector<2x128xf32>
    %73 = arith.addf %69, %72 : vector<2x128xf32>
    %c2_34 = arith.constant 2 : index
    %74 = memref.load %arg2[%c2_34] : memref<180xf32, #tpu.memory_space<smem>>
    %75 = vector.broadcast %74 : f32 to vector<2x128xf32>
    %76 = arith.mulf %75, %53 : vector<2x128xf32>
    %77 = arith.addf %73, %76 : vector<2x128xf32>
    %c3_35 = arith.constant 3 : index
    %78 = memref.load %arg2[%c3_35] : memref<180xf32, #tpu.memory_space<smem>>
    %79 = vector.broadcast %78 : f32 to vector<2x128xf32>
    %80 = arith.mulf %79, %56 : vector<2x128xf32>
    %81 = arith.addf %77, %80 : vector<2x128xf32>
    %c4_36 = arith.constant 4 : index
    %82 = memref.load %arg2[%c4_36] : memref<180xf32, #tpu.memory_space<smem>>
    %83 = vector.broadcast %82 : f32 to vector<2x128xf32>
    %84 = arith.mulf %83, %38 : vector<2x128xf32>
    %85 = arith.addf %81, %84 : vector<2x128xf32>
    %c5 = arith.constant 5 : index
    %86 = memref.load %arg2[%c5] : memref<180xf32, #tpu.memory_space<smem>>
    %87 = vector.broadcast %86 : f32 to vector<2x128xf32>
    %88 = arith.mulf %87, %59 : vector<2x128xf32>
    %89 = arith.addf %85, %88 : vector<2x128xf32>
    %c6 = arith.constant 6 : index
    %90 = memref.load %arg2[%c6] : memref<180xf32, #tpu.memory_space<smem>>
    %91 = vector.broadcast %90 : f32 to vector<2x128xf32>
    %92 = arith.mulf %91, %62 : vector<2x128xf32>
    %93 = arith.addf %89, %92 : vector<2x128xf32>
    %c7 = arith.constant 7 : index
    %94 = memref.load %arg2[%c7] : memref<180xf32, #tpu.memory_space<smem>>
    %95 = vector.broadcast %94 : f32 to vector<2x128xf32>
    %96 = arith.mulf %95, %47 : vector<2x128xf32>
    %97 = arith.addf %93, %96 : vector<2x128xf32>
    %c8 = arith.constant 8 : index
    %98 = memref.load %arg2[%c8] : memref<180xf32, #tpu.memory_space<smem>>
    %99 = vector.broadcast %98 : f32 to vector<2x128xf32>
    %100 = arith.mulf %99, %65 : vector<2x128xf32>
    %101 = arith.addf %97, %100 : vector<2x128xf32>
    %c36 = arith.constant 36 : index
    %102 = memref.load %arg2[%c36] : memref<180xf32, #tpu.memory_space<smem>>
    %103 = vector.broadcast %102 : f32 to vector<2x128xf32>
    %104 = arith.mulf %103, %50 : vector<2x128xf32>
    %105 = arith.addf %30, %104 : vector<2x128xf32>
    %c37 = arith.constant 37 : index
    %106 = memref.load %arg2[%c37] : memref<180xf32, #tpu.memory_space<smem>>
    %107 = vector.broadcast %106 : f32 to vector<2x128xf32>
    %108 = arith.mulf %107, %44 : vector<2x128xf32>
    %109 = arith.addf %105, %108 : vector<2x128xf32>
    %c38 = arith.constant 38 : index
    %110 = memref.load %arg2[%c38] : memref<180xf32, #tpu.memory_space<smem>>
    %111 = vector.broadcast %110 : f32 to vector<2x128xf32>
    %112 = arith.mulf %111, %53 : vector<2x128xf32>
    %113 = arith.addf %109, %112 : vector<2x128xf32>
    %c39 = arith.constant 39 : index
    %114 = memref.load %arg2[%c39] : memref<180xf32, #tpu.memory_space<smem>>
    %115 = vector.broadcast %114 : f32 to vector<2x128xf32>
    %116 = arith.mulf %115, %56 : vector<2x128xf32>
    %117 = arith.addf %113, %116 : vector<2x128xf32>
    %c40 = arith.constant 40 : index
    %118 = memref.load %arg2[%c40] : memref<180xf32, #tpu.memory_space<smem>>
    %119 = vector.broadcast %118 : f32 to vector<2x128xf32>
    %120 = arith.mulf %119, %38 : vector<2x128xf32>
    %121 = arith.addf %117, %120 : vector<2x128xf32>
    %c41 = arith.constant 41 : index
    %122 = memref.load %arg2[%c41] : memref<180xf32, #tpu.memory_space<smem>>
    %123 = vector.broadcast %122 : f32 to vector<2x128xf32>
    %124 = arith.mulf %123, %59 : vector<2x128xf32>
    %125 = arith.addf %121, %124 : vector<2x128xf32>
    %c42 = arith.constant 42 : index
    %126 = memref.load %arg2[%c42] : memref<180xf32, #tpu.memory_space<smem>>
    %127 = vector.broadcast %126 : f32 to vector<2x128xf32>
    %128 = arith.mulf %127, %62 : vector<2x128xf32>
    %129 = arith.addf %125, %128 : vector<2x128xf32>
    %c43 = arith.constant 43 : index
    %130 = memref.load %arg2[%c43] : memref<180xf32, #tpu.memory_space<smem>>
    %131 = vector.broadcast %130 : f32 to vector<2x128xf32>
    %132 = arith.mulf %131, %47 : vector<2x128xf32>
    %133 = arith.addf %129, %132 : vector<2x128xf32>
    %c44 = arith.constant 44 : index
    %134 = memref.load %arg2[%c44] : memref<180xf32, #tpu.memory_space<smem>>
    %135 = vector.broadcast %134 : f32 to vector<2x128xf32>
    %136 = arith.mulf %135, %65 : vector<2x128xf32>
    %137 = arith.addf %133, %136 : vector<2x128xf32>
    %c72 = arith.constant 72 : index
    %138 = memref.load %arg2[%c72] : memref<180xf32, #tpu.memory_space<smem>>
    %139 = vector.broadcast %138 : f32 to vector<2x128xf32>
    %140 = arith.mulf %139, %50 : vector<2x128xf32>
    %141 = arith.addf %32, %140 : vector<2x128xf32>
    %c73 = arith.constant 73 : index
    %142 = memref.load %arg2[%c73] : memref<180xf32, #tpu.memory_space<smem>>
    %143 = vector.broadcast %142 : f32 to vector<2x128xf32>
    %144 = arith.mulf %143, %44 : vector<2x128xf32>
    %145 = arith.addf %141, %144 : vector<2x128xf32>
    %c74 = arith.constant 74 : index
    %146 = memref.load %arg2[%c74] : memref<180xf32, #tpu.memory_space<smem>>
    %147 = vector.broadcast %146 : f32 to vector<2x128xf32>
    %148 = arith.mulf %147, %53 : vector<2x128xf32>
    %149 = arith.addf %145, %148 : vector<2x128xf32>
    %c75 = arith.constant 75 : index
    %150 = memref.load %arg2[%c75] : memref<180xf32, #tpu.memory_space<smem>>
    %151 = vector.broadcast %150 : f32 to vector<2x128xf32>
    %152 = arith.mulf %151, %56 : vector<2x128xf32>
    %153 = arith.addf %149, %152 : vector<2x128xf32>
    %c76 = arith.constant 76 : index
    %154 = memref.load %arg2[%c76] : memref<180xf32, #tpu.memory_space<smem>>
    %155 = vector.broadcast %154 : f32 to vector<2x128xf32>
    %156 = arith.mulf %155, %38 : vector<2x128xf32>
    %157 = arith.addf %153, %156 : vector<2x128xf32>
    %c77 = arith.constant 77 : index
    %158 = memref.load %arg2[%c77] : memref<180xf32, #tpu.memory_space<smem>>
    %159 = vector.broadcast %158 : f32 to vector<2x128xf32>
    %160 = arith.mulf %159, %59 : vector<2x128xf32>
    %161 = arith.addf %157, %160 : vector<2x128xf32>
    %c78 = arith.constant 78 : index
    %162 = memref.load %arg2[%c78] : memref<180xf32, #tpu.memory_space<smem>>
    %163 = vector.broadcast %162 : f32 to vector<2x128xf32>
    %164 = arith.mulf %163, %62 : vector<2x128xf32>
    %165 = arith.addf %161, %164 : vector<2x128xf32>
    %c79 = arith.constant 79 : index
    %166 = memref.load %arg2[%c79] : memref<180xf32, #tpu.memory_space<smem>>
    %167 = vector.broadcast %166 : f32 to vector<2x128xf32>
    %168 = arith.mulf %167, %47 : vector<2x128xf32>
    %169 = arith.addf %165, %168 : vector<2x128xf32>
    %c80 = arith.constant 80 : index
    %170 = memref.load %arg2[%c80] : memref<180xf32, #tpu.memory_space<smem>>
    %171 = vector.broadcast %170 : f32 to vector<2x128xf32>
    %172 = arith.mulf %171, %65 : vector<2x128xf32>
    %173 = arith.addf %169, %172 : vector<2x128xf32>
    %c108 = arith.constant 108 : index
    %174 = memref.load %arg2[%c108] : memref<180xf32, #tpu.memory_space<smem>>
    %175 = vector.broadcast %174 : f32 to vector<2x128xf32>
    %176 = arith.mulf %175, %50 : vector<2x128xf32>
    %177 = arith.addf %34, %176 : vector<2x128xf32>
    %c109 = arith.constant 109 : index
    %178 = memref.load %arg2[%c109] : memref<180xf32, #tpu.memory_space<smem>>
    %179 = vector.broadcast %178 : f32 to vector<2x128xf32>
    %180 = arith.mulf %179, %44 : vector<2x128xf32>
    %181 = arith.addf %177, %180 : vector<2x128xf32>
    %c110 = arith.constant 110 : index
    %182 = memref.load %arg2[%c110] : memref<180xf32, #tpu.memory_space<smem>>
    %183 = vector.broadcast %182 : f32 to vector<2x128xf32>
    %184 = arith.mulf %183, %53 : vector<2x128xf32>
    %185 = arith.addf %181, %184 : vector<2x128xf32>
    %c111 = arith.constant 111 : index
    %186 = memref.load %arg2[%c111] : memref<180xf32, #tpu.memory_space<smem>>
    %187 = vector.broadcast %186 : f32 to vector<2x128xf32>
    %188 = arith.mulf %187, %56 : vector<2x128xf32>
    %189 = arith.addf %185, %188 : vector<2x128xf32>
    %c112 = arith.constant 112 : index
    %190 = memref.load %arg2[%c112] : memref<180xf32, #tpu.memory_space<smem>>
    %191 = vector.broadcast %190 : f32 to vector<2x128xf32>
    %192 = arith.mulf %191, %38 : vector<2x128xf32>
    %193 = arith.addf %189, %192 : vector<2x128xf32>
    %c113 = arith.constant 113 : index
    %194 = memref.load %arg2[%c113] : memref<180xf32, #tpu.memory_space<smem>>
    %195 = vector.broadcast %194 : f32 to vector<2x128xf32>
    %196 = arith.mulf %195, %59 : vector<2x128xf32>
    %197 = arith.addf %193, %196 : vector<2x128xf32>
    %c114 = arith.constant 114 : index
    %198 = memref.load %arg2[%c114] : memref<180xf32, #tpu.memory_space<smem>>
    %199 = vector.broadcast %198 : f32 to vector<2x128xf32>
    %200 = arith.mulf %199, %62 : vector<2x128xf32>
    %201 = arith.addf %197, %200 : vector<2x128xf32>
    %c115 = arith.constant 115 : index
    %202 = memref.load %arg2[%c115] : memref<180xf32, #tpu.memory_space<smem>>
    %203 = vector.broadcast %202 : f32 to vector<2x128xf32>
    %204 = arith.mulf %203, %47 : vector<2x128xf32>
    %205 = arith.addf %201, %204 : vector<2x128xf32>
    %c116 = arith.constant 116 : index
    %206 = memref.load %arg2[%c116] : memref<180xf32, #tpu.memory_space<smem>>
    %207 = vector.broadcast %206 : f32 to vector<2x128xf32>
    %208 = arith.mulf %207, %65 : vector<2x128xf32>
    %209 = arith.addf %205, %208 : vector<2x128xf32>
    %c144 = arith.constant 144 : index
    %210 = memref.load %arg2[%c144] : memref<180xf32, #tpu.memory_space<smem>>
    %211 = vector.broadcast %210 : f32 to vector<2x128xf32>
    %212 = arith.mulf %211, %50 : vector<2x128xf32>
    %213 = arith.addf %36, %212 : vector<2x128xf32>
    %c145 = arith.constant 145 : index
    %214 = memref.load %arg2[%c145] : memref<180xf32, #tpu.memory_space<smem>>
    %215 = vector.broadcast %214 : f32 to vector<2x128xf32>
    %216 = arith.mulf %215, %44 : vector<2x128xf32>
    %217 = arith.addf %213, %216 : vector<2x128xf32>
    %c146 = arith.constant 146 : index
    %218 = memref.load %arg2[%c146] : memref<180xf32, #tpu.memory_space<smem>>
    %219 = vector.broadcast %218 : f32 to vector<2x128xf32>
    %220 = arith.mulf %219, %53 : vector<2x128xf32>
    %221 = arith.addf %217, %220 : vector<2x128xf32>
    %c147 = arith.constant 147 : index
    %222 = memref.load %arg2[%c147] : memref<180xf32, #tpu.memory_space<smem>>
    %223 = vector.broadcast %222 : f32 to vector<2x128xf32>
    %224 = arith.mulf %223, %56 : vector<2x128xf32>
    %225 = arith.addf %221, %224 : vector<2x128xf32>
    %c148 = arith.constant 148 : index
    %226 = memref.load %arg2[%c148] : memref<180xf32, #tpu.memory_space<smem>>
    %227 = vector.broadcast %226 : f32 to vector<2x128xf32>
    %228 = arith.mulf %227, %38 : vector<2x128xf32>
    %229 = arith.addf %225, %228 : vector<2x128xf32>
    %c149 = arith.constant 149 : index
    %230 = memref.load %arg2[%c149] : memref<180xf32, #tpu.memory_space<smem>>
    %231 = vector.broadcast %230 : f32 to vector<2x128xf32>
    %232 = arith.mulf %231, %59 : vector<2x128xf32>
    %233 = arith.addf %229, %232 : vector<2x128xf32>
    %c150 = arith.constant 150 : index
    %234 = memref.load %arg2[%c150] : memref<180xf32, #tpu.memory_space<smem>>
    %235 = vector.broadcast %234 : f32 to vector<2x128xf32>
    %236 = arith.mulf %235, %62 : vector<2x128xf32>
    %237 = arith.addf %233, %236 : vector<2x128xf32>
    %c151 = arith.constant 151 : index
    %238 = memref.load %arg2[%c151] : memref<180xf32, #tpu.memory_space<smem>>
    %239 = vector.broadcast %238 : f32 to vector<2x128xf32>
    %240 = arith.mulf %239, %47 : vector<2x128xf32>
    %241 = arith.addf %237, %240 : vector<2x128xf32>
    %c152 = arith.constant 152 : index
    %242 = memref.load %arg2[%c152] : memref<180xf32, #tpu.memory_space<smem>>
    %243 = vector.broadcast %242 : f32 to vector<2x128xf32>
    %244 = arith.mulf %243, %65 : vector<2x128xf32>
    %245 = arith.addf %241, %244 : vector<2x128xf32>
    %c0_37 = arith.constant 0 : index
    %c1_38 = arith.constant 1 : index
    %c0_39 = arith.constant 0 : index
    %c0_40 = arith.constant 0 : index
    %246 = vector.load %arg1[%c0_37, %c1_38, %c0_39, %c0_40] : memref<1x4x2x128xf32, #tpu.memory_space<vmem>>, vector<1x1x2x128xf32>
    %247 = vector.shape_cast %246 : vector<1x1x2x128xf32> to vector<2x128xf32>
    %c1_41 = arith.constant 1 : index
    %c0_42 = arith.constant 0 : index
    %248 = vector.load %arg6[%c1_41, %c0_42] : memref<4x128xf32, #tpu.memory_space<vmem>>, vector<2x128xf32>
    tpu.vector_store %arg6[%c1_41, %c0_42], %247 {strides = array<i32>} : memref<4x128xf32, #tpu.memory_space<vmem>>, vector<2x128xf32>,
    %c0_43 = arith.constant 0 : index
    %c0_44 = arith.constant 0 : index
    %249 = vector.load %arg6[%c0_43, %c0_44] : memref<4x128xf32, #tpu.memory_space<vmem>>, vector<2x128xf32>
    %c2_45 = arith.constant 2 : index
    %c0_46 = arith.constant 0 : index
    %250 = vector.load %arg6[%c2_45, %c0_46] : memref<4x128xf32, #tpu.memory_space<vmem>>, vector<2x128xf32>
    %c16_i32_47 = arith.constant 16 : i32
    %251 = tpu.dynamic_rotate %249 by %c16_i32_47 dim 1 : vector<2x128xf32>, i32 -> vector<2x128xf32>
    %c16_i32_48 = arith.constant 16 : i32
    %252 = tpu.dynamic_rotate %247 by %c16_i32_48 dim 1 : vector<2x128xf32>, i32 -> vector<2x128xf32>
    %253 = arith.select %22, %251, %252 : vector<2x128xi1>, vector<2x128xf32>
    %c112_i32_49 = arith.constant 112 : i32
    %254 = tpu.dynamic_rotate %250 by %c112_i32_49 dim 1 : vector<2x128xf32>, i32 -> vector<2x128xf32>
    %c112_i32_50 = arith.constant 112 : i32
    %255 = tpu.dynamic_rotate %247 by %c112_i32_50 dim 1 : vector<2x128xf32>, i32 -> vector<2x128xf32>
    %256 = arith.select %24, %254, %255 : vector<2x128xi1>, vector<2x128xf32>
    %c1_i32_51 = arith.constant 1 : i32
    %257 = tpu.dynamic_rotate %253 by %c1_i32_51 dim 1 : vector<2x128xf32>, i32 -> vector<2x128xf32>
    %cst_52 = arith.constant 0.000000e+00 : f32
    %258 = vector.broadcast %cst_52 : f32 to vector<2x128xf32>
    %259 = arith.select %18, %257, %258 : vector<2x128xi1>, vector<2x128xf32>
    %c127_i32_53 = arith.constant 127 : i32
    %260 = tpu.dynamic_rotate %253 by %c127_i32_53 dim 1 : vector<2x128xf32>, i32 -> vector<2x128xf32>
    %cst_54 = arith.constant 0.000000e+00 : f32
    %261 = vector.broadcast %cst_54 : f32 to vector<2x128xf32>
    %262 = arith.select %20, %260, %261 : vector<2x128xi1>, vector<2x128xf32>
    %c1_i32_55 = arith.constant 1 : i32
    %263 = tpu.dynamic_rotate %247 by %c1_i32_55 dim 1 : vector<2x128xf32>, i32 -> vector<2x128xf32>
    %cst_56 = arith.constant 0.000000e+00 : f32
    %264 = vector.broadcast %cst_56 : f32 to vector<2x128xf32>
    %265 = arith.select %18, %263, %264 : vector<2x128xi1>, vector<2x128xf32>
    %c127_i32_57 = arith.constant 127 : i32
    %266 = tpu.dynamic_rotate %247 by %c127_i32_57 dim 1 : vector<2x128xf32>, i32 -> vector<2x128xf32>
    %cst_58 = arith.constant 0.000000e+00 : f32
    %267 = vector.broadcast %cst_58 : f32 to vector<2x128xf32>
    %268 = arith.select %20, %266, %267 : vector<2x128xi1>, vector<2x128xf32>
    %c1_i32_59 = arith.constant 1 : i32
    %269 = tpu.dynamic_rotate %256 by %c1_i32_59 dim 1 : vector<2x128xf32>, i32 -> vector<2x128xf32>
    %cst_60 = arith.constant 0.000000e+00 : f32
    %270 = vector.broadcast %cst_60 : f32 to vector<2x128xf32>
    %271 = arith.select %18, %269, %270 : vector<2x128xi1>, vector<2x128xf32>
    %c127_i32_61 = arith.constant 127 : i32
    %272 = tpu.dynamic_rotate %256 by %c127_i32_61 dim 1 : vector<2x128xf32>, i32 -> vector<2x128xf32>
    %cst_62 = arith.constant 0.000000e+00 : f32
    %273 = vector.broadcast %cst_62 : f32 to vector<2x128xf32>
    %274 = arith.select %20, %272, %273 : vector<2x128xi1>, vector<2x128xf32>
    %c9 = arith.constant 9 : index
    %275 = memref.load %arg2[%c9] : memref<180xf32, #tpu.memory_space<smem>>
    %276 = vector.broadcast %275 : f32 to vector<2x128xf32>
    %277 = arith.mulf %276, %259 : vector<2x128xf32>
    %278 = arith.addf %101, %277 : vector<2x128xf32>
    %c10 = arith.constant 10 : index
    %279 = memref.load %arg2[%c10] : memref<180xf32, #tpu.memory_space<smem>>
    %280 = vector.broadcast %279 : f32 to vector<2x128xf32>
    %281 = arith.mulf %280, %253 : vector<2x128xf32>
    %282 = arith.addf %278, %281 : vector<2x128xf32>
    %c11 = arith.constant 11 : index
    %283 = memref.load %arg2[%c11] : memref<180xf32, #tpu.memory_space<smem>>
    %284 = vector.broadcast %283 : f32 to vector<2x128xf32>
    %285 = arith.mulf %284, %262 : vector<2x128xf32>
    %286 = arith.addf %282, %285 : vector<2x128xf32>
    %c12 = arith.constant 12 : index
    %287 = memref.load %arg2[%c12] : memref<180xf32, #tpu.memory_space<smem>>
    %288 = vector.broadcast %287 : f32 to vector<2x128xf32>
    %289 = arith.mulf %288, %265 : vector<2x128xf32>
    %290 = arith.addf %286, %289 : vector<2x128xf32>
    %c13 = arith.constant 13 : index
    %291 = memref.load %arg2[%c13] : memref<180xf32, #tpu.memory_space<smem>>
    %292 = vector.broadcast %291 : f32 to vector<2x128xf32>
    %293 = arith.mulf %292, %247 : vector<2x128xf32>
    %294 = arith.addf %290, %293 : vector<2x128xf32>
    %c14 = arith.constant 14 : index
    %295 = memref.load %arg2[%c14] : memref<180xf32, #tpu.memory_space<smem>>
    %296 = vector.broadcast %295 : f32 to vector<2x128xf32>
    %297 = arith.mulf %296, %268 : vector<2x128xf32>
    %298 = arith.addf %294, %297 : vector<2x128xf32>
    %c15 = arith.constant 15 : index
    %299 = memref.load %arg2[%c15] : memref<180xf32, #tpu.memory_space<smem>>
    %300 = vector.broadcast %299 : f32 to vector<2x128xf32>
    %301 = arith.mulf %300, %271 : vector<2x128xf32>
    %302 = arith.addf %298, %301 : vector<2x128xf32>
    %c16 = arith.constant 16 : index
    %303 = memref.load %arg2[%c16] : memref<180xf32, #tpu.memory_space<smem>>
    %304 = vector.broadcast %303 : f32 to vector<2x128xf32>
    %305 = arith.mulf %304, %256 : vector<2x128xf32>
    %306 = arith.addf %302, %305 : vector<2x128xf32>
    %c17 = arith.constant 17 : index
    %307 = memref.load %arg2[%c17] : memref<180xf32, #tpu.memory_space<smem>>
    %308 = vector.broadcast %307 : f32 to vector<2x128xf32>
    %309 = arith.mulf %308, %274 : vector<2x128xf32>
    %310 = arith.addf %306, %309 : vector<2x128xf32>
    %c45 = arith.constant 45 : index
    %311 = memref.load %arg2[%c45] : memref<180xf32, #tpu.memory_space<smem>>
    %312 = vector.broadcast %311 : f32 to vector<2x128xf32>
    %313 = arith.mulf %312, %259 : vector<2x128xf32>
    %314 = arith.addf %137, %313 : vector<2x128xf32>
    %c46 = arith.constant 46 : index
    %315 = memref.load %arg2[%c46] : memref<180xf32, #tpu.memory_space<smem>>
    %316 = vector.broadcast %315 : f32 to vector<2x128xf32>
    %317 = arith.mulf %316, %253 : vector<2x128xf32>
    %318 = arith.addf %314, %317 : vector<2x128xf32>
    %c47 = arith.constant 47 : index
    %319 = memref.load %arg2[%c47] : memref<180xf32, #tpu.memory_space<smem>>
    %320 = vector.broadcast %319 : f32 to vector<2x128xf32>
    %321 = arith.mulf %320, %262 : vector<2x128xf32>
    %322 = arith.addf %318, %321 : vector<2x128xf32>
    %c48 = arith.constant 48 : index
    %323 = memref.load %arg2[%c48] : memref<180xf32, #tpu.memory_space<smem>>
    %324 = vector.broadcast %323 : f32 to vector<2x128xf32>
    %325 = arith.mulf %324, %265 : vector<2x128xf32>
    %326 = arith.addf %322, %325 : vector<2x128xf32>
    %c49 = arith.constant 49 : index
    %327 = memref.load %arg2[%c49] : memref<180xf32, #tpu.memory_space<smem>>
    %328 = vector.broadcast %327 : f32 to vector<2x128xf32>
    %329 = arith.mulf %328, %247 : vector<2x128xf32>
    %330 = arith.addf %326, %329 : vector<2x128xf32>
    %c50 = arith.constant 50 : index
    %331 = memref.load %arg2[%c50] : memref<180xf32, #tpu.memory_space<smem>>
    %332 = vector.broadcast %331 : f32 to vector<2x128xf32>
    %333 = arith.mulf %332, %268 : vector<2x128xf32>
    %334 = arith.addf %330, %333 : vector<2x128xf32>
    %c51 = arith.constant 51 : index
    %335 = memref.load %arg2[%c51] : memref<180xf32, #tpu.memory_space<smem>>
    %336 = vector.broadcast %335 : f32 to vector<2x128xf32>
    %337 = arith.mulf %336, %271 : vector<2x128xf32>
    %338 = arith.addf %334, %337 : vector<2x128xf32>
    %c52 = arith.constant 52 : index
    %339 = memref.load %arg2[%c52] : memref<180xf32, #tpu.memory_space<smem>>
    %340 = vector.broadcast %339 : f32 to vector<2x128xf32>
    %341 = arith.mulf %340, %256 : vector<2x128xf32>
    %342 = arith.addf %338, %341 : vector<2x128xf32>
    %c53 = arith.constant 53 : index
    %343 = memref.load %arg2[%c53] : memref<180xf32, #tpu.memory_space<smem>>
    %344 = vector.broadcast %343 : f32 to vector<2x128xf32>
    %345 = arith.mulf %344, %274 : vector<2x128xf32>
    %346 = arith.addf %342, %345 : vector<2x128xf32>
    %c81 = arith.constant 81 : index
    %347 = memref.load %arg2[%c81] : memref<180xf32, #tpu.memory_space<smem>>
    %348 = vector.broadcast %347 : f32 to vector<2x128xf32>
    %349 = arith.mulf %348, %259 : vector<2x128xf32>
    %350 = arith.addf %173, %349 : vector<2x128xf32>
    %c82 = arith.constant 82 : index
    %351 = memref.load %arg2[%c82] : memref<180xf32, #tpu.memory_space<smem>>
    %352 = vector.broadcast %351 : f32 to vector<2x128xf32>
    %353 = arith.mulf %352, %253 : vector<2x128xf32>
    %354 = arith.addf %350, %353 : vector<2x128xf32>
    %c83 = arith.constant 83 : index
    %355 = memref.load %arg2[%c83] : memref<180xf32, #tpu.memory_space<smem>>
    %356 = vector.broadcast %355 : f32 to vector<2x128xf32>
    %357 = arith.mulf %356, %262 : vector<2x128xf32>
    %358 = arith.addf %354, %357 : vector<2x128xf32>
    %c84 = arith.constant 84 : index
    %359 = memref.load %arg2[%c84] : memref<180xf32, #tpu.memory_space<smem>>
    %360 = vector.broadcast %359 : f32 to vector<2x128xf32>
    %361 = arith.mulf %360, %265 : vector<2x128xf32>
    %362 = arith.addf %358, %361 : vector<2x128xf32>
    %c85 = arith.constant 85 : index
    %363 = memref.load %arg2[%c85] : memref<180xf32, #tpu.memory_space<smem>>
    %364 = vector.broadcast %363 : f32 to vector<2x128xf32>
    %365 = arith.mulf %364, %247 : vector<2x128xf32>
    %366 = arith.addf %362, %365 : vector<2x128xf32>
    %c86 = arith.constant 86 : index
    %367 = memref.load %arg2[%c86] : memref<180xf32, #tpu.memory_space<smem>>
    %368 = vector.broadcast %367 : f32 to vector<2x128xf32>
    %369 = arith.mulf %368, %268 : vector<2x128xf32>
    %370 = arith.addf %366, %369 : vector<2x128xf32>
    %c87 = arith.constant 87 : index
    %371 = memref.load %arg2[%c87] : memref<180xf32, #tpu.memory_space<smem>>
    %372 = vector.broadcast %371 : f32 to vector<2x128xf32>
    %373 = arith.mulf %372, %271 : vector<2x128xf32>
    %374 = arith.addf %370, %373 : vector<2x128xf32>
    %c88 = arith.constant 88 : index
    %375 = memref.load %arg2[%c88] : memref<180xf32, #tpu.memory_space<smem>>
    %376 = vector.broadcast %375 : f32 to vector<2x128xf32>
    %377 = arith.mulf %376, %256 : vector<2x128xf32>
    %378 = arith.addf %374, %377 : vector<2x128xf32>
    %c89 = arith.constant 89 : index
    %379 = memref.load %arg2[%c89] : memref<180xf32, #tpu.memory_space<smem>>
    %380 = vector.broadcast %379 : f32 to vector<2x128xf32>
    %381 = arith.mulf %380, %274 : vector<2x128xf32>
    %382 = arith.addf %378, %381 : vector<2x128xf32>
    %c117 = arith.constant 117 : index
    %383 = memref.load %arg2[%c117] : memref<180xf32, #tpu.memory_space<smem>>
    %384 = vector.broadcast %383 : f32 to vector<2x128xf32>
    %385 = arith.mulf %384, %259 : vector<2x128xf32>
    %386 = arith.addf %209, %385 : vector<2x128xf32>
    %c118 = arith.constant 118 : index
    %387 = memref.load %arg2[%c118] : memref<180xf32, #tpu.memory_space<smem>>
    %388 = vector.broadcast %387 : f32 to vector<2x128xf32>
    %389 = arith.mulf %388, %253 : vector<2x128xf32>
    %390 = arith.addf %386, %389 : vector<2x128xf32>
    %c119 = arith.constant 119 : index
    %391 = memref.load %arg2[%c119] : memref<180xf32, #tpu.memory_space<smem>>
    %392 = vector.broadcast %391 : f32 to vector<2x128xf32>
    %393 = arith.mulf %392, %262 : vector<2x128xf32>
    %394 = arith.addf %390, %393 : vector<2x128xf32>
    %c120 = arith.constant 120 : index
    %395 = memref.load %arg2[%c120] : memref<180xf32, #tpu.memory_space<smem>>
    %396 = vector.broadcast %395 : f32 to vector<2x128xf32>
    %397 = arith.mulf %396, %265 : vector<2x128xf32>
    %398 = arith.addf %394, %397 : vector<2x128xf32>
    %c121 = arith.constant 121 : index
    %399 = memref.load %arg2[%c121] : memref<180xf32, #tpu.memory_space<smem>>
    %400 = vector.broadcast %399 : f32 to vector<2x128xf32>
    %401 = arith.mulf %400, %247 : vector<2x128xf32>
    %402 = arith.addf %398, %401 : vector<2x128xf32>
    %c122 = arith.constant 122 : index
    %403 = memref.load %arg2[%c122] : memref<180xf32, #tpu.memory_space<smem>>
    %404 = vector.broadcast %403 : f32 to vector<2x128xf32>
    %405 = arith.mulf %404, %268 : vector<2x128xf32>
    %406 = arith.addf %402, %405 : vector<2x128xf32>
    %c123 = arith.constant 123 : index
    %407 = memref.load %arg2[%c123] : memref<180xf32, #tpu.memory_space<smem>>
    %408 = vector.broadcast %407 : f32 to vector<2x128xf32>
    %409 = arith.mulf %408, %271 : vector<2x128xf32>
    %410 = arith.addf %406, %409 : vector<2x128xf32>
    %c124 = arith.constant 124 : index
    %411 = memref.load %arg2[%c124] : memref<180xf32, #tpu.memory_space<smem>>
    %412 = vector.broadcast %411 : f32 to vector<2x128xf32>
    %413 = arith.mulf %412, %256 : vector<2x128xf32>
    %414 = arith.addf %410, %413 : vector<2x128xf32>
    %c125 = arith.constant 125 : index
    %415 = memref.load %arg2[%c125] : memref<180xf32, #tpu.memory_space<smem>>
    %416 = vector.broadcast %415 : f32 to vector<2x128xf32>
    %417 = arith.mulf %416, %274 : vector<2x128xf32>
    %418 = arith.addf %414, %417 : vector<2x128xf32>
    %c153 = arith.constant 153 : index
    %419 = memref.load %arg2[%c153] : memref<180xf32, #tpu.memory_space<smem>>
    %420 = vector.broadcast %419 : f32 to vector<2x128xf32>
    %421 = arith.mulf %420, %259 : vector<2x128xf32>
    %422 = arith.addf %245, %421 : vector<2x128xf32>
    %c154 = arith.constant 154 : index
    %423 = memref.load %arg2[%c154] : memref<180xf32, #tpu.memory_space<smem>>
    %424 = vector.broadcast %423 : f32 to vector<2x128xf32>
    %425 = arith.mulf %424, %253 : vector<2x128xf32>
    %426 = arith.addf %422, %425 : vector<2x128xf32>
    %c155 = arith.constant 155 : index
    %427 = memref.load %arg2[%c155] : memref<180xf32, #tpu.memory_space<smem>>
    %428 = vector.broadcast %427 : f32 to vector<2x128xf32>
    %429 = arith.mulf %428, %262 : vector<2x128xf32>
    %430 = arith.addf %426, %429 : vector<2x128xf32>
    %c156 = arith.constant 156 : index
    %431 = memref.load %arg2[%c156] : memref<180xf32, #tpu.memory_space<smem>>
    %432 = vector.broadcast %431 : f32 to vector<2x128xf32>
    %433 = arith.mulf %432, %265 : vector<2x128xf32>
    %434 = arith.addf %430, %433 : vector<2x128xf32>
    %c157 = arith.constant 157 : index
    %435 = memref.load %arg2[%c157] : memref<180xf32, #tpu.memory_space<smem>>
    %436 = vector.broadcast %435 : f32 to vector<2x128xf32>
    %437 = arith.mulf %436, %247 : vector<2x128xf32>
    %438 = arith.addf %434, %437 : vector<2x128xf32>
    %c158 = arith.constant 158 : index
    %439 = memref.load %arg2[%c158] : memref<180xf32, #tpu.memory_space<smem>>
    %440 = vector.broadcast %439 : f32 to vector<2x128xf32>
    %441 = arith.mulf %440, %268 : vector<2x128xf32>
    %442 = arith.addf %438, %441 : vector<2x128xf32>
    %c159 = arith.constant 159 : index
    %443 = memref.load %arg2[%c159] : memref<180xf32, #tpu.memory_space<smem>>
    %444 = vector.broadcast %443 : f32 to vector<2x128xf32>
    %445 = arith.mulf %444, %271 : vector<2x128xf32>
    %446 = arith.addf %442, %445 : vector<2x128xf32>
    %c160 = arith.constant 160 : index
    %447 = memref.load %arg2[%c160] : memref<180xf32, #tpu.memory_space<smem>>
    %448 = vector.broadcast %447 : f32 to vector<2x128xf32>
    %449 = arith.mulf %448, %256 : vector<2x128xf32>
    %450 = arith.addf %446, %449 : vector<2x128xf32>
    %c161 = arith.constant 161 : index
    %451 = memref.load %arg2[%c161] : memref<180xf32, #tpu.memory_space<smem>>
    %452 = vector.broadcast %451 : f32 to vector<2x128xf32>
    %453 = arith.mulf %452, %274 : vector<2x128xf32>
    %454 = arith.addf %450, %453 : vector<2x128xf32>
    %c0_63 = arith.constant 0 : index
    %c2_64 = arith.constant 2 : index
    %c0_65 = arith.constant 0 : index
    %c0_66 = arith.constant 0 : index
    %455 = vector.load %arg1[%c0_63, %c2_64, %c0_65, %c0_66] : memref<1x4x2x128xf32, #tpu.memory_space<vmem>>, vector<1x1x2x128xf32>
    %456 = vector.shape_cast %455 : vector<1x1x2x128xf32> to vector<2x128xf32>
    %c1_67 = arith.constant 1 : index
    %c0_68 = arith.constant 0 : index
    %457 = vector.load %arg6[%c1_67, %c0_68] : memref<4x128xf32, #tpu.memory_space<vmem>>, vector<2x128xf32>
    tpu.vector_store %arg6[%c1_67, %c0_68], %456 {strides = array<i32>} : memref<4x128xf32, #tpu.memory_space<vmem>>, vector<2x128xf32>,
    %c0_69 = arith.constant 0 : index
    %c0_70 = arith.constant 0 : index
    %458 = vector.load %arg6[%c0_69, %c0_70] : memref<4x128xf32, #tpu.memory_space<vmem>>, vector<2x128xf32>
    %c2_71 = arith.constant 2 : index
    %c0_72 = arith.constant 0 : index
    %459 = vector.load %arg6[%c2_71, %c0_72] : memref<4x128xf32, #tpu.memory_space<vmem>>, vector<2x128xf32>
    %c16_i32_73 = arith.constant 16 : i32
    %460 = tpu.dynamic_rotate %458 by %c16_i32_73 dim 1 : vector<2x128xf32>, i32 -> vector<2x128xf32>
    %c16_i32_74 = arith.constant 16 : i32
    %461 = tpu.dynamic_rotate %456 by %c16_i32_74 dim 1 : vector<2x128xf32>, i32 -> vector<2x128xf32>
    %462 = arith.select %22, %460, %461 : vector<2x128xi1>, vector<2x128xf32>
    %c112_i32_75 = arith.constant 112 : i32
    %463 = tpu.dynamic_rotate %459 by %c112_i32_75 dim 1 : vector<2x128xf32>, i32 -> vector<2x128xf32>
    %c112_i32_76 = arith.constant 112 : i32
    %464 = tpu.dynamic_rotate %456 by %c112_i32_76 dim 1 : vector<2x128xf32>, i32 -> vector<2x128xf32>
    %465 = arith.select %24, %463, %464 : vector<2x128xi1>, vector<2x128xf32>
    %c1_i32_77 = arith.constant 1 : i32
    %466 = tpu.dynamic_rotate %462 by %c1_i32_77 dim 1 : vector<2x128xf32>, i32 -> vector<2x128xf32>
    %cst_78 = arith.constant 0.000000e+00 : f32
    %467 = vector.broadcast %cst_78 : f32 to vector<2x128xf32>
    %468 = arith.select %18, %466, %467 : vector<2x128xi1>, vector<2x128xf32>
    %c127_i32_79 = arith.constant 127 : i32
    %469 = tpu.dynamic_rotate %462 by %c127_i32_79 dim 1 : vector<2x128xf32>, i32 -> vector<2x128xf32>
    %cst_80 = arith.constant 0.000000e+00 : f32
    %470 = vector.broadcast %cst_80 : f32 to vector<2x128xf32>
    %471 = arith.select %20, %469, %470 : vector<2x128xi1>, vector<2x128xf32>
    %c1_i32_81 = arith.constant 1 : i32
    %472 = tpu.dynamic_rotate %456 by %c1_i32_81 dim 1 : vector<2x128xf32>, i32 -> vector<2x128xf32>
    %cst_82 = arith.constant 0.000000e+00 : f32
    %473 = vector.broadcast %cst_82 : f32 to vector<2x128xf32>
    %474 = arith.select %18, %472, %473 : vector<2x128xi1>, vector<2x128xf32>
    %c127_i32_83 = arith.constant 127 : i32
    %475 = tpu.dynamic_rotate %456 by %c127_i32_83 dim 1 : vector<2x128xf32>, i32 -> vector<2x128xf32>
    %cst_84 = arith.constant 0.000000e+00 : f32
    %476 = vector.broadcast %cst_84 : f32 to vector<2x128xf32>
    %477 = arith.select %20, %475, %476 : vector<2x128xi1>, vector<2x128xf32>
    %c1_i32_85 = arith.constant 1 : i32
    %478 = tpu.dynamic_rotate %465 by %c1_i32_85 dim 1 : vector<2x128xf32>, i32 -> vector<2x128xf32>
    %cst_86 = arith.constant 0.000000e+00 : f32
    %479 = vector.broadcast %cst_86 : f32 to vector<2x128xf32>
    %480 = arith.select %18, %478, %479 : vector<2x128xi1>, vector<2x128xf32>
    %c127_i32_87 = arith.constant 127 : i32
    %481 = tpu.dynamic_rotate %465 by %c127_i32_87 dim 1 : vector<2x128xf32>, i32 -> vector<2x128xf32>
    %cst_88 = arith.constant 0.000000e+00 : f32
    %482 = vector.broadcast %cst_88 : f32 to vector<2x128xf32>
    %483 = arith.select %20, %481, %482 : vector<2x128xi1>, vector<2x128xf32>
    %c18 = arith.constant 18 : index
    %484 = memref.load %arg2[%c18] : memref<180xf32, #tpu.memory_space<smem>>
    %485 = vector.broadcast %484 : f32 to vector<2x128xf32>
    %486 = arith.mulf %485, %468 : vector<2x128xf32>
    %487 = arith.addf %310, %486 : vector<2x128xf32>
    %c19 = arith.constant 19 : index
    %488 = memref.load %arg2[%c19] : memref<180xf32, #tpu.memory_space<smem>>
    %489 = vector.broadcast %488 : f32 to vector<2x128xf32>
    %490 = arith.mulf %489, %462 : vector<2x128xf32>
    %491 = arith.addf %487, %490 : vector<2x128xf32>
    %c20 = arith.constant 20 : index
    %492 = memref.load %arg2[%c20] : memref<180xf32, #tpu.memory_space<smem>>
    %493 = vector.broadcast %492 : f32 to vector<2x128xf32>
    %494 = arith.mulf %493, %471 : vector<2x128xf32>
    %495 = arith.addf %491, %494 : vector<2x128xf32>
    %c21 = arith.constant 21 : index
    %496 = memref.load %arg2[%c21] : memref<180xf32, #tpu.memory_space<smem>>
    %497 = vector.broadcast %496 : f32 to vector<2x128xf32>
    %498 = arith.mulf %497, %474 : vector<2x128xf32>
    %499 = arith.addf %495, %498 : vector<2x128xf32>
    %c22 = arith.constant 22 : index
    %500 = memref.load %arg2[%c22] : memref<180xf32, #tpu.memory_space<smem>>
    %501 = vector.broadcast %500 : f32 to vector<2x128xf32>
    %502 = arith.mulf %501, %456 : vector<2x128xf32>
    %503 = arith.addf %499, %502 : vector<2x128xf32>
    %c23 = arith.constant 23 : index
    %504 = memref.load %arg2[%c23] : memref<180xf32, #tpu.memory_space<smem>>
    %505 = vector.broadcast %504 : f32 to vector<2x128xf32>
    %506 = arith.mulf %505, %477 : vector<2x128xf32>
    %507 = arith.addf %503, %506 : vector<2x128xf32>
    %c24 = arith.constant 24 : index
    %508 = memref.load %arg2[%c24] : memref<180xf32, #tpu.memory_space<smem>>
    %509 = vector.broadcast %508 : f32 to vector<2x128xf32>
    %510 = arith.mulf %509, %480 : vector<2x128xf32>
    %511 = arith.addf %507, %510 : vector<2x128xf32>
    %c25 = arith.constant 25 : index
    %512 = memref.load %arg2[%c25] : memref<180xf32, #tpu.memory_space<smem>>
    %513 = vector.broadcast %512 : f32 to vector<2x128xf32>
    %514 = arith.mulf %513, %465 : vector<2x128xf32>
    %515 = arith.addf %511, %514 : vector<2x128xf32>
    %c26 = arith.constant 26 : index
    %516 = memref.load %arg2[%c26] : memref<180xf32, #tpu.memory_space<smem>>
    %517 = vector.broadcast %516 : f32 to vector<2x128xf32>
    %518 = arith.mulf %517, %483 : vector<2x128xf32>
    %519 = arith.addf %515, %518 : vector<2x128xf32>
    %c54 = arith.constant 54 : index
    %520 = memref.load %arg2[%c54] : memref<180xf32, #tpu.memory_space<smem>>
    %521 = vector.broadcast %520 : f32 to vector<2x128xf32>
    %522 = arith.mulf %521, %468 : vector<2x128xf32>
    %523 = arith.addf %346, %522 : vector<2x128xf32>
    %c55 = arith.constant 55 : index
    %524 = memref.load %arg2[%c55] : memref<180xf32, #tpu.memory_space<smem>>
    %525 = vector.broadcast %524 : f32 to vector<2x128xf32>
    %526 = arith.mulf %525, %462 : vector<2x128xf32>
    %527 = arith.addf %523, %526 : vector<2x128xf32>
    %c56 = arith.constant 56 : index
    %528 = memref.load %arg2[%c56] : memref<180xf32, #tpu.memory_space<smem>>
    %529 = vector.broadcast %528 : f32 to vector<2x128xf32>
    %530 = arith.mulf %529, %471 : vector<2x128xf32>
    %531 = arith.addf %527, %530 : vector<2x128xf32>
    %c57 = arith.constant 57 : index
    %532 = memref.load %arg2[%c57] : memref<180xf32, #tpu.memory_space<smem>>
    %533 = vector.broadcast %532 : f32 to vector<2x128xf32>
    %534 = arith.mulf %533, %474 : vector<2x128xf32>
    %535 = arith.addf %531, %534 : vector<2x128xf32>
    %c58 = arith.constant 58 : index
    %536 = memref.load %arg2[%c58] : memref<180xf32, #tpu.memory_space<smem>>
    %537 = vector.broadcast %536 : f32 to vector<2x128xf32>
    %538 = arith.mulf %537, %456 : vector<2x128xf32>
    %539 = arith.addf %535, %538 : vector<2x128xf32>
    %c59 = arith.constant 59 : index
    %540 = memref.load %arg2[%c59] : memref<180xf32, #tpu.memory_space<smem>>
    %541 = vector.broadcast %540 : f32 to vector<2x128xf32>
    %542 = arith.mulf %541, %477 : vector<2x128xf32>
    %543 = arith.addf %539, %542 : vector<2x128xf32>
    %c60 = arith.constant 60 : index
    %544 = memref.load %arg2[%c60] : memref<180xf32, #tpu.memory_space<smem>>
    %545 = vector.broadcast %544 : f32 to vector<2x128xf32>
    %546 = arith.mulf %545, %480 : vector<2x128xf32>
    %547 = arith.addf %543, %546 : vector<2x128xf32>
    %c61 = arith.constant 61 : index
    %548 = memref.load %arg2[%c61] : memref<180xf32, #tpu.memory_space<smem>>
    %549 = vector.broadcast %548 : f32 to vector<2x128xf32>
    %550 = arith.mulf %549, %465 : vector<2x128xf32>
    %551 = arith.addf %547, %550 : vector<2x128xf32>
    %c62 = arith.constant 62 : index
    %552 = memref.load %arg2[%c62] : memref<180xf32, #tpu.memory_space<smem>>
    %553 = vector.broadcast %552 : f32 to vector<2x128xf32>
    %554 = arith.mulf %553, %483 : vector<2x128xf32>
    %555 = arith.addf %551, %554 : vector<2x128xf32>
    %c90 = arith.constant 90 : index
    %556 = memref.load %arg2[%c90] : memref<180xf32, #tpu.memory_space<smem>>
    %557 = vector.broadcast %556 : f32 to vector<2x128xf32>
    %558 = arith.mulf %557, %468 : vector<2x128xf32>
    %559 = arith.addf %382, %558 : vector<2x128xf32>
    %c91 = arith.constant 91 : index
    %560 = memref.load %arg2[%c91] : memref<180xf32, #tpu.memory_space<smem>>
    %561 = vector.broadcast %560 : f32 to vector<2x128xf32>
    %562 = arith.mulf %561, %462 : vector<2x128xf32>
    %563 = arith.addf %559, %562 : vector<2x128xf32>
    %c92 = arith.constant 92 : index
    %564 = memref.load %arg2[%c92] : memref<180xf32, #tpu.memory_space<smem>>
    %565 = vector.broadcast %564 : f32 to vector<2x128xf32>
    %566 = arith.mulf %565, %471 : vector<2x128xf32>
    %567 = arith.addf %563, %566 : vector<2x128xf32>
    %c93 = arith.constant 93 : index
    %568 = memref.load %arg2[%c93] : memref<180xf32, #tpu.memory_space<smem>>
    %569 = vector.broadcast %568 : f32 to vector<2x128xf32>
    %570 = arith.mulf %569, %474 : vector<2x128xf32>
    %571 = arith.addf %567, %570 : vector<2x128xf32>
    %c94 = arith.constant 94 : index
    %572 = memref.load %arg2[%c94] : memref<180xf32, #tpu.memory_space<smem>>
    %573 = vector.broadcast %572 : f32 to vector<2x128xf32>
    %574 = arith.mulf %573, %456 : vector<2x128xf32>
    %575 = arith.addf %571, %574 : vector<2x128xf32>
    %c95 = arith.constant 95 : index
    %576 = memref.load %arg2[%c95] : memref<180xf32, #tpu.memory_space<smem>>
    %577 = vector.broadcast %576 : f32 to vector<2x128xf32>
    %578 = arith.mulf %577, %477 : vector<2x128xf32>
    %579 = arith.addf %575, %578 : vector<2x128xf32>
    %c96 = arith.constant 96 : index
    %580 = memref.load %arg2[%c96] : memref<180xf32, #tpu.memory_space<smem>>
    %581 = vector.broadcast %580 : f32 to vector<2x128xf32>
    %582 = arith.mulf %581, %480 : vector<2x128xf32>
    %583 = arith.addf %579, %582 : vector<2x128xf32>
    %c97 = arith.constant 97 : index
    %584 = memref.load %arg2[%c97] : memref<180xf32, #tpu.memory_space<smem>>
    %585 = vector.broadcast %584 : f32 to vector<2x128xf32>
    %586 = arith.mulf %585, %465 : vector<2x128xf32>
    %587 = arith.addf %583, %586 : vector<2x128xf32>
    %c98 = arith.constant 98 : index
    %588 = memref.load %arg2[%c98] : memref<180xf32, #tpu.memory_space<smem>>
    %589 = vector.broadcast %588 : f32 to vector<2x128xf32>
    %590 = arith.mulf %589, %483 : vector<2x128xf32>
    %591 = arith.addf %587, %590 : vector<2x128xf32>
    %c126 = arith.constant 126 : index
    %592 = memref.load %arg2[%c126] : memref<180xf32, #tpu.memory_space<smem>>
    %593 = vector.broadcast %592 : f32 to vector<2x128xf32>
    %594 = arith.mulf %593, %468 : vector<2x128xf32>
    %595 = arith.addf %418, %594 : vector<2x128xf32>
    %c127 = arith.constant 127 : index
    %596 = memref.load %arg2[%c127] : memref<180xf32, #tpu.memory_space<smem>>
    %597 = vector.broadcast %596 : f32 to vector<2x128xf32>
    %598 = arith.mulf %597, %462 : vector<2x128xf32>
    %599 = arith.addf %595, %598 : vector<2x128xf32>
    %c128 = arith.constant 128 : index
    %600 = memref.load %arg2[%c128] : memref<180xf32, #tpu.memory_space<smem>>
    %601 = vector.broadcast %600 : f32 to vector<2x128xf32>
    %602 = arith.mulf %601, %471 : vector<2x128xf32>
    %603 = arith.addf %599, %602 : vector<2x128xf32>
    %c129 = arith.constant 129 : index
    %604 = memref.load %arg2[%c129] : memref<180xf32, #tpu.memory_space<smem>>
    %605 = vector.broadcast %604 : f32 to vector<2x128xf32>
    %606 = arith.mulf %605, %474 : vector<2x128xf32>
    %607 = arith.addf %603, %606 : vector<2x128xf32>
    %c130 = arith.constant 130 : index
    %608 = memref.load %arg2[%c130] : memref<180xf32, #tpu.memory_space<smem>>
    %609 = vector.broadcast %608 : f32 to vector<2x128xf32>
    %610 = arith.mulf %609, %456 : vector<2x128xf32>
    %611 = arith.addf %607, %610 : vector<2x128xf32>
    %c131 = arith.constant 131 : index
    %612 = memref.load %arg2[%c131] : memref<180xf32, #tpu.memory_space<smem>>
    %613 = vector.broadcast %612 : f32 to vector<2x128xf32>
    %614 = arith.mulf %613, %477 : vector<2x128xf32>
    %615 = arith.addf %611, %614 : vector<2x128xf32>
    %c132 = arith.constant 132 : index
    %616 = memref.load %arg2[%c132] : memref<180xf32, #tpu.memory_space<smem>>
    %617 = vector.broadcast %616 : f32 to vector<2x128xf32>
    %618 = arith.mulf %617, %480 : vector<2x128xf32>
    %619 = arith.addf %615, %618 : vector<2x128xf32>
    %c133 = arith.constant 133 : index
    %620 = memref.load %arg2[%c133] : memref<180xf32, #tpu.memory_space<smem>>
    %621 = vector.broadcast %620 : f32 to vector<2x128xf32>
    %622 = arith.mulf %621, %465 : vector<2x128xf32>
    %623 = arith.addf %619, %622 : vector<2x128xf32>
    %c134 = arith.constant 134 : index
    %624 = memref.load %arg2[%c134] : memref<180xf32, #tpu.memory_space<smem>>
    %625 = vector.broadcast %624 : f32 to vector<2x128xf32>
    %626 = arith.mulf %625, %483 : vector<2x128xf32>
    %627 = arith.addf %623, %626 : vector<2x128xf32>
    %c162 = arith.constant 162 : index
    %628 = memref.load %arg2[%c162] : memref<180xf32, #tpu.memory_space<smem>>
    %629 = vector.broadcast %628 : f32 to vector<2x128xf32>
    %630 = arith.mulf %629, %468 : vector<2x128xf32>
    %631 = arith.addf %454, %630 : vector<2x128xf32>
    %c163 = arith.constant 163 : index
    %632 = memref.load %arg2[%c163] : memref<180xf32, #tpu.memory_space<smem>>
    %633 = vector.broadcast %632 : f32 to vector<2x128xf32>
    %634 = arith.mulf %633, %462 : vector<2x128xf32>
    %635 = arith.addf %631, %634 : vector<2x128xf32>
    %c164 = arith.constant 164 : index
    %636 = memref.load %arg2[%c164] : memref<180xf32, #tpu.memory_space<smem>>
    %637 = vector.broadcast %636 : f32 to vector<2x128xf32>
    %638 = arith.mulf %637, %471 : vector<2x128xf32>
    %639 = arith.addf %635, %638 : vector<2x128xf32>
    %c165 = arith.constant 165 : index
    %640 = memref.load %arg2[%c165] : memref<180xf32, #tpu.memory_space<smem>>
    %641 = vector.broadcast %640 : f32 to vector<2x128xf32>
    %642 = arith.mulf %641, %474 : vector<2x128xf32>
    %643 = arith.addf %639, %642 : vector<2x128xf32>
    %c166 = arith.constant 166 : index
    %644 = memref.load %arg2[%c166] : memref<180xf32, #tpu.memory_space<smem>>
    %645 = vector.broadcast %644 : f32 to vector<2x128xf32>
    %646 = arith.mulf %645, %456 : vector<2x128xf32>
    %647 = arith.addf %643, %646 : vector<2x128xf32>
    %c167 = arith.constant 167 : index
    %648 = memref.load %arg2[%c167] : memref<180xf32, #tpu.memory_space<smem>>
    %649 = vector.broadcast %648 : f32 to vector<2x128xf32>
    %650 = arith.mulf %649, %477 : vector<2x128xf32>
    %651 = arith.addf %647, %650 : vector<2x128xf32>
    %c168 = arith.constant 168 : index
    %652 = memref.load %arg2[%c168] : memref<180xf32, #tpu.memory_space<smem>>
    %653 = vector.broadcast %652 : f32 to vector<2x128xf32>
    %654 = arith.mulf %653, %480 : vector<2x128xf32>
    %655 = arith.addf %651, %654 : vector<2x128xf32>
    %c169 = arith.constant 169 : index
    %656 = memref.load %arg2[%c169] : memref<180xf32, #tpu.memory_space<smem>>
    %657 = vector.broadcast %656 : f32 to vector<2x128xf32>
    %658 = arith.mulf %657, %465 : vector<2x128xf32>
    %659 = arith.addf %655, %658 : vector<2x128xf32>
    %c170 = arith.constant 170 : index
    %660 = memref.load %arg2[%c170] : memref<180xf32, #tpu.memory_space<smem>>
    %661 = vector.broadcast %660 : f32 to vector<2x128xf32>
    %662 = arith.mulf %661, %483 : vector<2x128xf32>
    %663 = arith.addf %659, %662 : vector<2x128xf32>
    %c0_89 = arith.constant 0 : index
    %c3_90 = arith.constant 3 : index
    %c0_91 = arith.constant 0 : index
    %c0_92 = arith.constant 0 : index
    %664 = vector.load %arg1[%c0_89, %c3_90, %c0_91, %c0_92] : memref<1x4x2x128xf32, #tpu.memory_space<vmem>>, vector<1x1x2x128xf32>
    %665 = vector.shape_cast %664 : vector<1x1x2x128xf32> to vector<2x128xf32>
    %c1_93 = arith.constant 1 : index
    %c0_94 = arith.constant 0 : index
    %666 = vector.load %arg6[%c1_93, %c0_94] : memref<4x128xf32, #tpu.memory_space<vmem>>, vector<2x128xf32>
    tpu.vector_store %arg6[%c1_93, %c0_94], %665 {strides = array<i32>} : memref<4x128xf32, #tpu.memory_space<vmem>>, vector<2x128xf32>,
    %c0_95 = arith.constant 0 : index
    %c0_96 = arith.constant 0 : index
    %667 = vector.load %arg6[%c0_95, %c0_96] : memref<4x128xf32, #tpu.memory_space<vmem>>, vector<2x128xf32>
    %c2_97 = arith.constant 2 : index
    %c0_98 = arith.constant 0 : index
    %668 = vector.load %arg6[%c2_97, %c0_98] : memref<4x128xf32, #tpu.memory_space<vmem>>, vector<2x128xf32>
    %c16_i32_99 = arith.constant 16 : i32
    %669 = tpu.dynamic_rotate %667 by %c16_i32_99 dim 1 : vector<2x128xf32>, i32 -> vector<2x128xf32>
    %c16_i32_100 = arith.constant 16 : i32
    %670 = tpu.dynamic_rotate %665 by %c16_i32_100 dim 1 : vector<2x128xf32>, i32 -> vector<2x128xf32>
    %671 = arith.select %22, %669, %670 : vector<2x128xi1>, vector<2x128xf32>
    %c112_i32_101 = arith.constant 112 : i32
    %672 = tpu.dynamic_rotate %668 by %c112_i32_101 dim 1 : vector<2x128xf32>, i32 -> vector<2x128xf32>
    %c112_i32_102 = arith.constant 112 : i32
    %673 = tpu.dynamic_rotate %665 by %c112_i32_102 dim 1 : vector<2x128xf32>, i32 -> vector<2x128xf32>
    %674 = arith.select %24, %672, %673 : vector<2x128xi1>, vector<2x128xf32>
    %c1_i32_103 = arith.constant 1 : i32
    %675 = tpu.dynamic_rotate %671 by %c1_i32_103 dim 1 : vector<2x128xf32>, i32 -> vector<2x128xf32>
    %cst_104 = arith.constant 0.000000e+00 : f32
    %676 = vector.broadcast %cst_104 : f32 to vector<2x128xf32>
    %677 = arith.select %18, %675, %676 : vector<2x128xi1>, vector<2x128xf32>
    %c127_i32_105 = arith.constant 127 : i32
    %678 = tpu.dynamic_rotate %671 by %c127_i32_105 dim 1 : vector<2x128xf32>, i32 -> vector<2x128xf32>
    %cst_106 = arith.constant 0.000000e+00 : f32
    %679 = vector.broadcast %cst_106 : f32 to vector<2x128xf32>
    %680 = arith.select %20, %678, %679 : vector<2x128xi1>, vector<2x128xf32>
    %c1_i32_107 = arith.constant 1 : i32
    %681 = tpu.dynamic_rotate %665 by %c1_i32_107 dim 1 : vector<2x128xf32>, i32 -> vector<2x128xf32>
    %cst_108 = arith.constant 0.000000e+00 : f32
    %682 = vector.broadcast %cst_108 : f32 to vector<2x128xf32>
    %683 = arith.select %18, %681, %682 : vector<2x128xi1>, vector<2x128xf32>
    %c127_i32_109 = arith.constant 127 : i32
    %684 = tpu.dynamic_rotate %665 by %c127_i32_109 dim 1 : vector<2x128xf32>, i32 -> vector<2x128xf32>
    %cst_110 = arith.constant 0.000000e+00 : f32
    %685 = vector.broadcast %cst_110 : f32 to vector<2x128xf32>
    %686 = arith.select %20, %684, %685 : vector<2x128xi1>, vector<2x128xf32>
    %c1_i32_111 = arith.constant 1 : i32
    %687 = tpu.dynamic_rotate %674 by %c1_i32_111 dim 1 : vector<2x128xf32>, i32 -> vector<2x128xf32>
    %cst_112 = arith.constant 0.000000e+00 : f32
    %688 = vector.broadcast %cst_112 : f32 to vector<2x128xf32>
    %689 = arith.select %18, %687, %688 : vector<2x128xi1>, vector<2x128xf32>
    %c127_i32_113 = arith.constant 127 : i32
    %690 = tpu.dynamic_rotate %674 by %c127_i32_113 dim 1 : vector<2x128xf32>, i32 -> vector<2x128xf32>
    %cst_114 = arith.constant 0.000000e+00 : f32
    %691 = vector.broadcast %cst_114 : f32 to vector<2x128xf32>
    %692 = arith.select %20, %690, %691 : vector<2x128xi1>, vector<2x128xf32>
    %c27 = arith.constant 27 : index
    %693 = memref.load %arg2[%c27] : memref<180xf32, #tpu.memory_space<smem>>
    %694 = vector.broadcast %693 : f32 to vector<2x128xf32>
    %695 = arith.mulf %694, %677 : vector<2x128xf32>
    %696 = arith.addf %519, %695 : vector<2x128xf32>
    %c28 = arith.constant 28 : index
    %697 = memref.load %arg2[%c28] : memref<180xf32, #tpu.memory_space<smem>>
    %698 = vector.broadcast %697 : f32 to vector<2x128xf32>
    %699 = arith.mulf %698, %671 : vector<2x128xf32>
    %700 = arith.addf %696, %699 : vector<2x128xf32>
    %c29 = arith.constant 29 : index
    %701 = memref.load %arg2[%c29] : memref<180xf32, #tpu.memory_space<smem>>
    %702 = vector.broadcast %701 : f32 to vector<2x128xf32>
    %703 = arith.mulf %702, %680 : vector<2x128xf32>
    %704 = arith.addf %700, %703 : vector<2x128xf32>
    %c30 = arith.constant 30 : index
    %705 = memref.load %arg2[%c30] : memref<180xf32, #tpu.memory_space<smem>>
    %706 = vector.broadcast %705 : f32 to vector<2x128xf32>
    %707 = arith.mulf %706, %683 : vector<2x128xf32>
    %708 = arith.addf %704, %707 : vector<2x128xf32>
    %c31 = arith.constant 31 : index
    %709 = memref.load %arg2[%c31] : memref<180xf32, #tpu.memory_space<smem>>
    %710 = vector.broadcast %709 : f32 to vector<2x128xf32>
    %711 = arith.mulf %710, %665 : vector<2x128xf32>
    %712 = arith.addf %708, %711 : vector<2x128xf32>
    %c32 = arith.constant 32 : index
    %713 = memref.load %arg2[%c32] : memref<180xf32, #tpu.memory_space<smem>>
    %714 = vector.broadcast %713 : f32 to vector<2x128xf32>
    %715 = arith.mulf %714, %686 : vector<2x128xf32>
    %716 = arith.addf %712, %715 : vector<2x128xf32>
    %c33 = arith.constant 33 : index
    %717 = memref.load %arg2[%c33] : memref<180xf32, #tpu.memory_space<smem>>
    %718 = vector.broadcast %717 : f32 to vector<2x128xf32>
    %719 = arith.mulf %718, %689 : vector<2x128xf32>
    %720 = arith.addf %716, %719 : vector<2x128xf32>
    %c34 = arith.constant 34 : index
    %721 = memref.load %arg2[%c34] : memref<180xf32, #tpu.memory_space<smem>>
    %722 = vector.broadcast %721 : f32 to vector<2x128xf32>
    %723 = arith.mulf %722, %674 : vector<2x128xf32>
    %724 = arith.addf %720, %723 : vector<2x128xf32>
    %c35 = arith.constant 35 : index
    %725 = memref.load %arg2[%c35] : memref<180xf32, #tpu.memory_space<smem>>
    %726 = vector.broadcast %725 : f32 to vector<2x128xf32>
    %727 = arith.mulf %726, %692 : vector<2x128xf32>
    %728 = arith.addf %724, %727 : vector<2x128xf32>
    %c63 = arith.constant 63 : index
    %729 = memref.load %arg2[%c63] : memref<180xf32, #tpu.memory_space<smem>>
    %730 = vector.broadcast %729 : f32 to vector<2x128xf32>
    %731 = arith.mulf %730, %677 : vector<2x128xf32>
    %732 = arith.addf %555, %731 : vector<2x128xf32>
    %c64 = arith.constant 64 : index
    %733 = memref.load %arg2[%c64] : memref<180xf32, #tpu.memory_space<smem>>
    %734 = vector.broadcast %733 : f32 to vector<2x128xf32>
    %735 = arith.mulf %734, %671 : vector<2x128xf32>
    %736 = arith.addf %732, %735 : vector<2x128xf32>
    %c65 = arith.constant 65 : index
    %737 = memref.load %arg2[%c65] : memref<180xf32, #tpu.memory_space<smem>>
    %738 = vector.broadcast %737 : f32 to vector<2x128xf32>
    %739 = arith.mulf %738, %680 : vector<2x128xf32>
    %740 = arith.addf %736, %739 : vector<2x128xf32>
    %c66 = arith.constant 66 : index
    %741 = memref.load %arg2[%c66] : memref<180xf32, #tpu.memory_space<smem>>
    %742 = vector.broadcast %741 : f32 to vector<2x128xf32>
    %743 = arith.mulf %742, %683 : vector<2x128xf32>
    %744 = arith.addf %740, %743 : vector<2x128xf32>
    %c67 = arith.constant 67 : index
    %745 = memref.load %arg2[%c67] : memref<180xf32, #tpu.memory_space<smem>>
    %746 = vector.broadcast %745 : f32 to vector<2x128xf32>
    %747 = arith.mulf %746, %665 : vector<2x128xf32>
    %748 = arith.addf %744, %747 : vector<2x128xf32>
    %c68 = arith.constant 68 : index
    %749 = memref.load %arg2[%c68] : memref<180xf32, #tpu.memory_space<smem>>
    %750 = vector.broadcast %749 : f32 to vector<2x128xf32>
    %751 = arith.mulf %750, %686 : vector<2x128xf32>
    %752 = arith.addf %748, %751 : vector<2x128xf32>
    %c69 = arith.constant 69 : index
    %753 = memref.load %arg2[%c69] : memref<180xf32, #tpu.memory_space<smem>>
    %754 = vector.broadcast %753 : f32 to vector<2x128xf32>
    %755 = arith.mulf %754, %689 : vector<2x128xf32>
    %756 = arith.addf %752, %755 : vector<2x128xf32>
    %c70 = arith.constant 70 : index
    %757 = memref.load %arg2[%c70] : memref<180xf32, #tpu.memory_space<smem>>
    %758 = vector.broadcast %757 : f32 to vector<2x128xf32>
    %759 = arith.mulf %758, %674 : vector<2x128xf32>
    %760 = arith.addf %756, %759 : vector<2x128xf32>
    %c71 = arith.constant 71 : index
    %761 = memref.load %arg2[%c71] : memref<180xf32, #tpu.memory_space<smem>>
    %762 = vector.broadcast %761 : f32 to vector<2x128xf32>
    %763 = arith.mulf %762, %692 : vector<2x128xf32>
    %764 = arith.addf %760, %763 : vector<2x128xf32>
    %c99 = arith.constant 99 : index
    %765 = memref.load %arg2[%c99] : memref<180xf32, #tpu.memory_space<smem>>
    %766 = vector.broadcast %765 : f32 to vector<2x128xf32>
    %767 = arith.mulf %766, %677 : vector<2x128xf32>
    %768 = arith.addf %591, %767 : vector<2x128xf32>
    %c100 = arith.constant 100 : index
    %769 = memref.load %arg2[%c100] : memref<180xf32, #tpu.memory_space<smem>>
    %770 = vector.broadcast %769 : f32 to vector<2x128xf32>
    %771 = arith.mulf %770, %671 : vector<2x128xf32>
    %772 = arith.addf %768, %771 : vector<2x128xf32>
    %c101 = arith.constant 101 : index
    %773 = memref.load %arg2[%c101] : memref<180xf32, #tpu.memory_space<smem>>
    %774 = vector.broadcast %773 : f32 to vector<2x128xf32>
    %775 = arith.mulf %774, %680 : vector<2x128xf32>
    %776 = arith.addf %772, %775 : vector<2x128xf32>
    %c102 = arith.constant 102 : index
    %777 = memref.load %arg2[%c102] : memref<180xf32, #tpu.memory_space<smem>>
    %778 = vector.broadcast %777 : f32 to vector<2x128xf32>
    %779 = arith.mulf %778, %683 : vector<2x128xf32>
    %780 = arith.addf %776, %779 : vector<2x128xf32>
    %c103 = arith.constant 103 : index
    %781 = memref.load %arg2[%c103] : memref<180xf32, #tpu.memory_space<smem>>
    %782 = vector.broadcast %781 : f32 to vector<2x128xf32>
    %783 = arith.mulf %782, %665 : vector<2x128xf32>
    %784 = arith.addf %780, %783 : vector<2x128xf32>
    %c104 = arith.constant 104 : index
    %785 = memref.load %arg2[%c104] : memref<180xf32, #tpu.memory_space<smem>>
    %786 = vector.broadcast %785 : f32 to vector<2x128xf32>
    %787 = arith.mulf %786, %686 : vector<2x128xf32>
    %788 = arith.addf %784, %787 : vector<2x128xf32>
    %c105 = arith.constant 105 : index
    %789 = memref.load %arg2[%c105] : memref<180xf32, #tpu.memory_space<smem>>
    %790 = vector.broadcast %789 : f32 to vector<2x128xf32>
    %791 = arith.mulf %790, %689 : vector<2x128xf32>
    %792 = arith.addf %788, %791 : vector<2x128xf32>
    %c106 = arith.constant 106 : index
    %793 = memref.load %arg2[%c106] : memref<180xf32, #tpu.memory_space<smem>>
    %794 = vector.broadcast %793 : f32 to vector<2x128xf32>
    %795 = arith.mulf %794, %674 : vector<2x128xf32>
    %796 = arith.addf %792, %795 : vector<2x128xf32>
    %c107 = arith.constant 107 : index
    %797 = memref.load %arg2[%c107] : memref<180xf32, #tpu.memory_space<smem>>
    %798 = vector.broadcast %797 : f32 to vector<2x128xf32>
    %799 = arith.mulf %798, %692 : vector<2x128xf32>
    %800 = arith.addf %796, %799 : vector<2x128xf32>
    %c135 = arith.constant 135 : index
    %801 = memref.load %arg2[%c135] : memref<180xf32, #tpu.memory_space<smem>>
    %802 = vector.broadcast %801 : f32 to vector<2x128xf32>
    %803 = arith.mulf %802, %677 : vector<2x128xf32>
    %804 = arith.addf %627, %803 : vector<2x128xf32>
    %c136 = arith.constant 136 : index
    %805 = memref.load %arg2[%c136] : memref<180xf32, #tpu.memory_space<smem>>
    %806 = vector.broadcast %805 : f32 to vector<2x128xf32>
    %807 = arith.mulf %806, %671 : vector<2x128xf32>
    %808 = arith.addf %804, %807 : vector<2x128xf32>
    %c137 = arith.constant 137 : index
    %809 = memref.load %arg2[%c137] : memref<180xf32, #tpu.memory_space<smem>>
    %810 = vector.broadcast %809 : f32 to vector<2x128xf32>
    %811 = arith.mulf %810, %680 : vector<2x128xf32>
    %812 = arith.addf %808, %811 : vector<2x128xf32>
    %c138 = arith.constant 138 : index
    %813 = memref.load %arg2[%c138] : memref<180xf32, #tpu.memory_space<smem>>
    %814 = vector.broadcast %813 : f32 to vector<2x128xf32>
    %815 = arith.mulf %814, %683 : vector<2x128xf32>
    %816 = arith.addf %812, %815 : vector<2x128xf32>
    %c139 = arith.constant 139 : index
    %817 = memref.load %arg2[%c139] : memref<180xf32, #tpu.memory_space<smem>>
    %818 = vector.broadcast %817 : f32 to vector<2x128xf32>
    %819 = arith.mulf %818, %665 : vector<2x128xf32>
    %820 = arith.addf %816, %819 : vector<2x128xf32>
    %c140 = arith.constant 140 : index
    %821 = memref.load %arg2[%c140] : memref<180xf32, #tpu.memory_space<smem>>
    %822 = vector.broadcast %821 : f32 to vector<2x128xf32>
    %823 = arith.mulf %822, %686 : vector<2x128xf32>
    %824 = arith.addf %820, %823 : vector<2x128xf32>
    %c141 = arith.constant 141 : index
    %825 = memref.load %arg2[%c141] : memref<180xf32, #tpu.memory_space<smem>>
    %826 = vector.broadcast %825 : f32 to vector<2x128xf32>
    %827 = arith.mulf %826, %689 : vector<2x128xf32>
    %828 = arith.addf %824, %827 : vector<2x128xf32>
    %c142 = arith.constant 142 : index
    %829 = memref.load %arg2[%c142] : memref<180xf32, #tpu.memory_space<smem>>
    %830 = vector.broadcast %829 : f32 to vector<2x128xf32>
    %831 = arith.mulf %830, %674 : vector<2x128xf32>
    %832 = arith.addf %828, %831 : vector<2x128xf32>
    %c143 = arith.constant 143 : index
    %833 = memref.load %arg2[%c143] : memref<180xf32, #tpu.memory_space<smem>>
    %834 = vector.broadcast %833 : f32 to vector<2x128xf32>
    %835 = arith.mulf %834, %692 : vector<2x128xf32>
    %836 = arith.addf %832, %835 : vector<2x128xf32>
    %c171 = arith.constant 171 : index
    %837 = memref.load %arg2[%c171] : memref<180xf32, #tpu.memory_space<smem>>
    %838 = vector.broadcast %837 : f32 to vector<2x128xf32>
    %839 = arith.mulf %838, %677 : vector<2x128xf32>
    %840 = arith.addf %663, %839 : vector<2x128xf32>
    %c172 = arith.constant 172 : index
    %841 = memref.load %arg2[%c172] : memref<180xf32, #tpu.memory_space<smem>>
    %842 = vector.broadcast %841 : f32 to vector<2x128xf32>
    %843 = arith.mulf %842, %671 : vector<2x128xf32>
    %844 = arith.addf %840, %843 : vector<2x128xf32>
    %c173 = arith.constant 173 : index
    %845 = memref.load %arg2[%c173] : memref<180xf32, #tpu.memory_space<smem>>
    %846 = vector.broadcast %845 : f32 to vector<2x128xf32>
    %847 = arith.mulf %846, %680 : vector<2x128xf32>
    %848 = arith.addf %844, %847 : vector<2x128xf32>
    %c174 = arith.constant 174 : index
    %849 = memref.load %arg2[%c174] : memref<180xf32, #tpu.memory_space<smem>>
    %850 = vector.broadcast %849 : f32 to vector<2x128xf32>
    %851 = arith.mulf %850, %683 : vector<2x128xf32>
    %852 = arith.addf %848, %851 : vector<2x128xf32>
    %c175 = arith.constant 175 : index
    %853 = memref.load %arg2[%c175] : memref<180xf32, #tpu.memory_space<smem>>
    %854 = vector.broadcast %853 : f32 to vector<2x128xf32>
    %855 = arith.mulf %854, %665 : vector<2x128xf32>
    %856 = arith.addf %852, %855 : vector<2x128xf32>
    %c176 = arith.constant 176 : index
    %857 = memref.load %arg2[%c176] : memref<180xf32, #tpu.memory_space<smem>>
    %858 = vector.broadcast %857 : f32 to vector<2x128xf32>
    %859 = arith.mulf %858, %686 : vector<2x128xf32>
    %860 = arith.addf %856, %859 : vector<2x128xf32>
    %c177 = arith.constant 177 : index
    %861 = memref.load %arg2[%c177] : memref<180xf32, #tpu.memory_space<smem>>
    %862 = vector.broadcast %861 : f32 to vector<2x128xf32>
    %863 = arith.mulf %862, %689 : vector<2x128xf32>
    %864 = arith.addf %860, %863 : vector<2x128xf32>
    %c178 = arith.constant 178 : index
    %865 = memref.load %arg2[%c178] : memref<180xf32, #tpu.memory_space<smem>>
    %866 = vector.broadcast %865 : f32 to vector<2x128xf32>
    %867 = arith.mulf %866, %674 : vector<2x128xf32>
    %868 = arith.addf %864, %867 : vector<2x128xf32>
    %c179 = arith.constant 179 : index
    %869 = memref.load %arg2[%c179] : memref<180xf32, #tpu.memory_space<smem>>
    %870 = vector.broadcast %869 : f32 to vector<2x128xf32>
    %871 = arith.mulf %870, %692 : vector<2x128xf32>
    %872 = arith.addf %868, %871 : vector<2x128xf32>
    %c0_115 = arith.constant 0 : index
    %c0_116 = arith.constant 0 : index
    %c0_117 = arith.constant 0 : index
    %c0_118 = arith.constant 0 : index
    %873 = vector.load %arg4[%c0_115, %c0_116, %c0_117, %c0_118] : memref<1x4x2x128xf32, #tpu.memory_space<vmem>>, vector<1x1x2x128xf32>
    %874 = vector.shape_cast %873 : vector<1x1x2x128xf32> to vector<2x128xf32>
    %875 = vector.shape_cast %728 : vector<2x128xf32> to vector<1x1x2x128xf32>
    tpu.vector_store %arg4[%c0_115, %c0_116, %c0_117, %c0_118], %875 {strides = array<i32>} : memref<1x4x2x128xf32, #tpu.memory_space<vmem>>, vector<1x1x2x128xf32>,
    %c0_119 = arith.constant 0 : index
    %c1_120 = arith.constant 1 : index
    %c0_121 = arith.constant 0 : index
    %c0_122 = arith.constant 0 : index
    %876 = vector.load %arg4[%c0_119, %c1_120, %c0_121, %c0_122] : memref<1x4x2x128xf32, #tpu.memory_space<vmem>>, vector<1x1x2x128xf32>
    %877 = vector.shape_cast %876 : vector<1x1x2x128xf32> to vector<2x128xf32>
    %878 = vector.shape_cast %764 : vector<2x128xf32> to vector<1x1x2x128xf32>
    tpu.vector_store %arg4[%c0_119, %c1_120, %c0_121, %c0_122], %878 {strides = array<i32>} : memref<1x4x2x128xf32, #tpu.memory_space<vmem>>, vector<1x1x2x128xf32>,
    %c0_123 = arith.constant 0 : index
    %c2_124 = arith.constant 2 : index
    %c0_125 = arith.constant 0 : index
    %c0_126 = arith.constant 0 : index
    %879 = vector.load %arg4[%c0_123, %c2_124, %c0_125, %c0_126] : memref<1x4x2x128xf32, #tpu.memory_space<vmem>>, vector<1x1x2x128xf32>
    %880 = vector.shape_cast %879 : vector<1x1x2x128xf32> to vector<2x128xf32>
    %881 = vector.shape_cast %800 : vector<2x128xf32> to vector<1x1x2x128xf32>
    tpu.vector_store %arg4[%c0_123, %c2_124, %c0_125, %c0_126], %881 {strides = array<i32>} : memref<1x4x2x128xf32, #tpu.memory_space<vmem>>, vector<1x1x2x128xf32>,
    %c0_127 = arith.constant 0 : index
    %c3_128 = arith.constant 3 : index
    %c0_129 = arith.constant 0 : index
    %c0_130 = arith.constant 0 : index
    %882 = vector.load %arg4[%c0_127, %c3_128, %c0_129, %c0_130] : memref<1x4x2x128xf32, #tpu.memory_space<vmem>>, vector<1x1x2x128xf32>
    %883 = vector.shape_cast %882 : vector<1x1x2x128xf32> to vector<2x128xf32>
    %884 = vector.shape_cast %836 : vector<2x128xf32> to vector<1x1x2x128xf32>
    tpu.vector_store %arg4[%c0_127, %c3_128, %c0_129, %c0_130], %884 {strides = array<i32>} : memref<1x4x2x128xf32, #tpu.memory_space<vmem>>, vector<1x1x2x128xf32>,
    %c0_131 = arith.constant 0 : index
    %c0_132 = arith.constant 0 : index
    %c0_133 = arith.constant 0 : index
    %c0_134 = arith.constant 0 : index
    %885 = vector.load %arg5[%c0_131, %c0_132, %c0_133, %c0_134] : memref<1x1x2x128xf32, #tpu.memory_space<vmem>>, vector<1x1x2x128xf32>
    %886 = vector.shape_cast %885 : vector<1x1x2x128xf32> to vector<2x128xf32>
    %887 = vector.shape_cast %872 : vector<2x128xf32> to vector<1x1x2x128xf32>
    tpu.vector_store %arg5[%c0_131, %c0_132, %c0_133, %c0_134], %887 {strides = array<i32>} : memref<1x1x2x128xf32, #tpu.memory_space<vmem>>, vector<1x1x2x128xf32>,
    return
  }
  func.func @transform_0(%arg0: i32) -> (i32, i32, i32, i32) {
    %c0_i32 = arith.constant 0 : i32
    %c0_i32_0 = arith.constant 0 : i32
    %c0_i32_1 = arith.constant 0 : i32
    %c0_i32_2 = arith.constant 0 : i32
    return %arg0, %c0_i32, %c0_i32_0, %c0_i32_1 : i32, i32, i32, i32
  }
  func.func @transform_1(%arg0: i32) -> i32 {
    %c0_i32 = arith.constant 0 : i32
    %c0_i32_0 = arith.constant 0 : i32
    return %c0_i32 : i32
  }
  func.func @transform_2(%arg0: i32) -> i32 {
    %c0_i32 = arith.constant 0 : i32
    %c0_i32_0 = arith.constant 0 : i32
    return %c0_i32 : i32
  }
  func.func @transform_3(%arg0: i32) -> (i32, i32, i32, i32) {
    %c0_i32 = arith.constant 0 : i32
    %c0_i32_0 = arith.constant 0 : i32
    %c0_i32_1 = arith.constant 0 : i32
    %c0_i32_2 = arith.constant 0 : i32
    return %arg0, %c0_i32, %c0_i32_0, %c0_i32_1 : i32, i32, i32, i32
  }
  func.func @transform_4(%arg0: i32) -> (i32, i32, i32, i32) {
    %c0_i32 = arith.constant 0 : i32
    %c0_i32_0 = arith.constant 0 : i32
    %c0_i32_1 = arith.constant 0 : i32
    %c0_i32_2 = arith.constant 0 : i32
    return %arg0, %c0_i32, %c0_i32_0, %c0_i32_1 : i32, i32, i32, i32
  }
}

</mosaic_0001>

<llo_original>
// kernel: fcos_head_forward.1
$region0: #{fcos_head_forward.1}
  #allocation0 [shape = 'u32[]', space=smem, size = 0x4, offset = 0x4, fixed_abs, tag = 'smem constant byte address 0x4 - core index']
  #allocation1 [shape = 'u32[144,128]{1,0:T(1,128)}', space=vmem, size = 0x12000, scoped, tag = 'internal scratch']
  #allocation2 [shape = 'f32[4,128]{1,0:T(4,128)}', space=vmem, size = 0x800, scoped, tag = 'scratch operand']
  %s0 = inlined_call_operand.hbm [shape: f32[2,4,2,128], index: 0, kind: input, shape index: {}]
  %s1 = inlined_call_operand.hbm [shape: f32[180], index: 1, kind: input, shape index: {}]
  %s2 = inlined_call_operand.hbm [shape: f32[5], index: 2, kind: input, shape index: {}]
  %s3 = inlined_call_operand.hbm [shape: f32[2,4,2,128], index: 3, kind: output, shape index: {0}]
  %s4 = inlined_call_operand.hbm [shape: f32[2,1,2,128], index: 4, kind: output, shape index: {1}]
  %5 = xla_tuple %s3, %s4
  %s6 = sld [smem:[#allocation0]]
  $region65: #{fcos_head_forward.1} parent=0
    _
  %s8 = ssub.s32 1, %s6
  %s9 = scalar_select 0, %s8, %s6
  $region1: #{fcos_head_forward.1} parent=0
    #allocation3 [shape = 'u8[8192]{0}', space=vmem, size = 0x2000, scoped, tag = 'input window, operand 0']
    #allocation4 [shape = 's32[2]{0}', space=sflag, size = 0x8, scoped, tag = 'scoped memory for fcos_head_forward.1']
    #allocation5 [shape = 's32[2]{0}', space=sflag, size = 0x8, scoped, tag = 'scoped memory for fcos_head_forward.1']
    #allocation6 [shape = 's32[2]{0}', space=sflag, size = 0x8, scoped, tag = 'scoped memory for fcos_head_forward.1']
    #allocation7 [shape = 'u8[1024]{0}', space=smem, size = 0x400, scoped, tag = 'input window, operand 1, single buffered']
    #allocation8 [shape = 'u8[512]{0}', space=smem, size = 0x200, scoped, tag = 'input window, operand 2, single buffered']
    #allocation9 [shape = 's32[1]{0}', space=sflag, size = 0x4, scoped, tag = 'scoped memory for fcos_head_forward.1']
    #allocation10 [shape = 'u8[8192]{0}', space=vmem, size = 0x2000, scoped, tag = 'output window, operand 0']
    #allocation11 [shape = 'u8[2048]{0}', space=vmem, size = 0x800, scoped, tag = 'output window, operand 1']
    #allocation12 [shape = 's32[2]{0}', space=sflag, size = 0x8, scoped, tag = 'scoped memory for fcos_head_forward.1']
    %10 = vsyncpa [#allocation4], 0
    %s11 = scalar_lea.sflag [#allocation4], 1
    %12 = vsyncpa %s11, 0
    %13 = vsyncpa [#allocation6], 0
    %14 = vsyncpa [#allocation9], 0
    %15 = vsyncpa [#allocation5], 0
    %s16 = scalar_lea.sflag [#allocation5], 1
    %17 = vsyncpa %s16, 0
    %18 = vsyncpa [#allocation12], 0
    %s19 = scalar_lea.sflag [#allocation12], 1
    %20 = vsyncpa %s19, 0
    loop: start=0, step=1, limit=4
    $region2: #{fcos_head_forward.1} parent=1 // loop_pre_header
      _
    $region3: #{fcos_head_forward.1} parent=1 // loop_header
      %s22 = sphi 0, %s26
      %p23 = scmp.ge.s32.totalorder %s22, 4
      %s32 = sphi 0, %s34
      %s35 = sphi 0, %s32
      %s36 = sphi 0, %s35
      %s52 = sphi 0, %s36
      %s56 = sphi 0, %s56
      %s58 = sphi 0, %s56
      %s59 = sphi 0, %s58
      %s73 = sphi 0, %s59
      %s77 = sphi 0, %s77
      %s79 = sphi 0, %s77
      %s80 = sphi 0, %s79
      %s94 = sphi 0, %s80
      %s100 = sphi 0, %s102
      %s103 = sphi 0, %s100
      %s104 = sphi 0, %s103
      %s120 = sphi 0, %s104
      %s126 = sphi 0, %s128
      %s129 = sphi 0, %s126
      %s130 = sphi 0, %s129
      %s146 = sphi 0, %s130
    $region4: #{fcos_head_forward.1} parent=1 // loop_header_branch
      %25 = sbr.rel (%p23) target = $region8
    $region5: #{fcos_head_forward.1} parent=1 // loop_body
      %s27 = ssub.s32 %s22, 1
      %s28 = ssub.s32 %s22, 2
      %s29 = sadd.s32 %s22, 1
      %s30 = ssub.s32 %s22, %s29
      %p31 = scmp.eq.s32.totalorder %s30, 0
      %s33 = sadd.s32 %s32, 1
      %s34 = scalar_select %p31, %s32, %s33
      %p37 = pneg %p31
      %p38 = scmp.eq.s32.totalorder %s22, 1
      %p39 = por %p37, %p38
      %p40 = scmp.ne.s32.totalorder %s32, %s35
      %p41 = scmp.eq.s32.totalorder %s22, 0
      %p42 = por %p40, %p41
      %p43 = scmp.ne.s32.totalorder %s32, %s35
      %p44 = scmp.eq.s32.totalorder %s27, 1
      %p45 = por %p43, %p44
      %p46 = scmp.ne.s32.totalorder %s35, %s36
      %p47 = scmp.eq.s32.totalorder %s27, 0
      %p48 = por %p46, %p47
      %p49 = scmp.ne.s32.totalorder %s35, %s36
      %p50 = scmp.eq.s32.totalorder %s28, 1
      %p51 = por %p49, %p50
      %p53 = scmp.ne.s32.totalorder %s36, %s52
      %p54 = scmp.eq.s32.totalorder %s28, 0
      %p55 = por %p53, %p54
      %s57 = sadd.s32 %s56, 1
      %p60 = scmp.eq.s32.totalorder %s22, 1
      %p61 = scmp.ne.s32.totalorder %s56, %s58
      %p62 = scmp.eq.s32.totalorder %s22, 0
      %p63 = por %p61, %p62
      %p64 = scmp.ne.s32.totalorder %s56, %s58
      %p65 = scmp.eq.s32.totalorder %s27, 1
      %p66 = por %p64, %p65
      %p67 = scmp.ne.s32.totalorder %s58, %s59
      %p68 = scmp.eq.s32.totalorder %s27, 0
      %p69 = por %p67, %p68
      %p70 = scmp.ne.s32.totalorder %s58, %s59
      %p71 = scmp.eq.s32.totalorder %s28, 1
      %p72 = por %p70, %p71
      %p74 = scmp.ne.s32.totalorder %s59, %s73
      %p75 = scmp.eq.s32.totalorder %s28, 0
      %p76 = por %p74, %p75
      %s78 = sadd.s32 %s77, 1
      %p81 = scmp.eq.s32.totalorder %s22, 1
      %p82 = scmp.ne.s32.totalorder %s77, %s79
      %p83 = scmp.eq.s32.totalorder %s22, 0
      %p84 = por %p82, %p83
      %p85 = scmp.ne.s32.totalorder %s77, %s79
      %p86 = scmp.eq.s32.totalorder %s27, 1
      %p87 = por %p85, %p86
      %p88 = scmp.ne.s32.totalorder %s79, %s80
      %p89 = scmp.eq.s32.totalorder %s27, 0
      %p90 = por %p88, %p89
      %p91 = scmp.ne.s32.totalorder %s79, %s80
      %p92 = scmp.eq.s32.totalorder %s28, 1
      %p93 = por %p91, %p92
      %p95 = scmp.ne.s32.totalorder %s80, %s94
      %p96 = scmp.eq.s32.totalorder %s28, 0
      %p97 = por %p95, %p96
      %s98 = ssub.s32 %s22, %s29
      %p99 = scmp.eq.s32.totalorder %s98, 0
      %s101 = sadd.s32 %s100, 1
      %s102 = scalar_select %p99, %s100, %s101
      %p105 = pneg %p99
      %p106 = scmp.eq.s32.totalorder %s22, 1
      %p107 = por %p105, %p106
      %p108 = scmp.ne.s32.totalorder %s100, %s103
      %p109 = scmp.eq.s32.totalorder %s22, 0
      %p110 = por %p108, %p109
      %p111 = scmp.ne.s32.totalorder %s100, %s103
      %p112 = scmp.eq.s32.totalorder %s27, 1
      %p113 = por %p111, %p112
      %p114 = scmp.ne.s32.totalorder %s103, %s104
      %p115 = scmp.eq.s32.totalorder %s27, 0
      %p116 = por %p114, %p115
      %p117 = scmp.ne.s32.totalorder %s103, %s104
      %p118 = scmp.eq.s32.totalorder %s28, 1
      %p119 = por %p117, %p118
      %p121 = scmp.ne.s32.totalorder %s104, %s120
      %p122 = scmp.eq.s32.totalorder %s28, 0
      %p123 = por %p121, %p122
      %s124 = ssub.s32 %s22, %s29
      %p125 = scmp.eq.s32.totalorder %s124, 0
      %s127 = sadd.s32 %s126, 1
      %s128 = scalar_select %p125, %s126, %s127
      %p131 = pneg %p125
      %p132 = scmp.eq.s32.totalorder %s22, 1
      %p133 = por %p131, %p132
      %p134 = scmp.ne.s32.totalorder %s126, %s129
      %p135 = scmp.eq.s32.totalorder %s22, 0
      %p136 = por %p134, %p135
      %p137 = scmp.ne.s32.totalorder %s126, %s129
      %p138 = scmp.eq.s32.totalorder %s27, 1
      %p139 = por %p137, %p138
      %p140 = scmp.ne.s32.totalorder %s129, %s130
      %p141 = scmp.eq.s32.totalorder %s27, 0
      %p142 = por %p140, %p141
      %p143 = scmp.ne.s32.totalorder %s129, %s130
      %p144 = scmp.eq.s32.totalorder %s28, 1
      %p145 = por %p143, %p144
      %p147 = scmp.ne.s32.totalorder %s130, %s146
      %p148 = scmp.eq.s32.totalorder %s28, 0
      %p149 = por %p147, %p148
      %p150 = scmp.le.s32.totalorder 1, %s22
      %p151 = scmp.lt.s32.totalorder %s22, 3
      %p152 = pnand %p150, %p151
      %p153 = pneg %p152
      // Predicated region
      $region9: #{fcos_head_forward.1} parent=5 // pred_check
        _
      $region10: #{fcos_head_forward.1} parent=5 // pred_check_branch
        %155 = sbr.rel (%p152) target = $region12
      $region11: #{fcos_head_forward.1} parent=5 // pred_region
        %s156 = ssub.s32 %s22, 1
        // Predicated region
        $region13: #{fcos_head_forward.1} parent=11 // pred_check
          %p157 = pneg %p69
        $region14: #{fcos_head_forward.1} parent=11 // pred_check_branch
          %159 = sbr.rel (%p157) target = $region16
        $region15: #{fcos_head_forward.1} parent=11 // pred_region
          %s161 = ssub.s32 32, 32
          %162 = vsyncadd [#allocation6], %s161
          %165 = dma.hbm_to_smem %s1, 32, [#allocation7], [#allocation6]
        $region16: #{fcos_head_forward.1} parent=11 // pred_fallthru
          _
        // Predicated region
        $region17: #{fcos_head_forward.1} parent=11 // pred_check
          %p166 = pneg %p90
        $region18: #{fcos_head_forward.1} parent=11 // pred_check_branch
          %168 = sbr.rel (%p166) target = $region20
        $region19: #{fcos_head_forward.1} parent=11 // pred_region
          %s170 = ssub.s32 16, 16
          %171 = vsyncadd [#allocation9], %s170
          %174 = dma.hbm_to_smem %s2, 16, [#allocation8], [#allocation9]
        $region20: #{fcos_head_forward.1} parent=11 // pred_fallthru
          _
      $region12: #{fcos_head_forward.1} parent=5 // pred_fallthru
        _
      %p175 = scmp.lt.s32.totalorder %s22, 2
      // Predicated region
      $region21: #{fcos_head_forward.1} parent=5 // pred_check
        %p176 = pneg %p175
      $region22: #{fcos_head_forward.1} parent=5 // pred_check_branch
        %178 = sbr.rel (%p176) target = $region24
      $region23: #{fcos_head_forward.1} parent=5 // pred_region
        // Predicated region
        $region25: #{fcos_head_forward.1} parent=23 // pred_check
          %p179 = pneg %p42
        $region26: #{fcos_head_forward.1} parent=23 // pred_check_branch
          %181 = sbr.rel (%p179) target = $region28
        $region27: #{fcos_head_forward.1} parent=23 // pred_region
          %s182 = sand.u32 %s32, 1
          %s183 = scalar_lea.sflag [#allocation4], %s182
          %s184 = sand.u32 %s32, 1
          %s185 = smul.addr %s184, 8
          %s186 = scalar_lea.vmem [#allocation3], %s185
          %s188 = ssub.s32 128, 128
          %189 = vsyncadd %s183, %s188
          %s190 = smul.addr %s22, 4
          %s191 = smul.addr %s190, 32
          %s192 = scalar_lea.hbm %s0, %s191
          %s193 = sshll.u32 %s186, 4
          %s194 = int_to_ptr.vmem [resolvable:$true] %s193
          %199 = dma.hbm_to_vmem [thread:$0]  %s192, 128, %s194, %s183, 32, 32, 2
        $region28: #{fcos_head_forward.1} parent=23 // pred_fallthru
          _
      $region24: #{fcos_head_forward.1} parent=5 // pred_fallthru
        _
      %p200 = scmp.le.s32.totalorder 1, %s22
      %p201 = scmp.lt.s32.totalorder %s22, 3
      %p202 = pnand %p200, %p201
      %p203 = pneg %p202
      // Predicated region
      $region29: #{fcos_head_forward.1} parent=5 // pred_check
        _
      $region30: #{fcos_head_forward.1} parent=5 // pred_check_branch
        %205 = sbr.rel (%p202) target = $region32
      $region31: #{fcos_head_forward.1} parent=5 // pred_region
        %s206 = ssub.s32 %s22, 1
        %s207 = sand.u32 %s35, 1
        %s208 = scalar_lea.sflag [#allocation4], %s207
        %s209 = sand.u32 %s35, 1
        %s210 = smul.addr %s209, 8
        %s211 = scalar_lea.vmem [#allocation3], %s210
        // Predicated region
        $region33: #{fcos_head_forward.1} parent=31 // pred_check
          %p212 = pneg %p48
        $region34: #{fcos_head_forward.1} parent=31 // pred_check_branch
          %214 = sbr.rel (%p212) target = $region36
        $region35: #{fcos_head_forward.1} parent=31 // pred_region
          %215 = dma.done %s208, 128
        $region36: #{fcos_head_forward.1} parent=31 // pred_fallthru
          _
        // Predicated region
        $region37: #{fcos_head_forward.1} parent=31 // pred_check
          %p216 = pneg %p69
        $region38: #{fcos_head_forward.1} parent=31 // pred_check_branch
          %218 = sbr.rel (%p216) target = $region40
        $region39: #{fcos_head_forward.1} parent=31 // pred_region
          %219 = dma.done [#allocation6], 32
        $region40: #{fcos_head_forward.1} parent=31 // pred_fallthru
          _
        // Predicated region
        $region41: #{fcos_head_forward.1} parent=31 // pred_check
          %p220 = pneg %p90
        $region42: #{fcos_head_forward.1} parent=31 // pred_check_branch
          %222 = sbr.rel (%p220) target = $region44
        $region43: #{fcos_head_forward.1} parent=31 // pred_region
          %223 = dma.done [#allocation9], 16
        $region44: #{fcos_head_forward.1} parent=31 // pred_fallthru
          _
        %224 = sfence
        %s225 = sand.u32 %s35, 1
        %s226 = scalar_lea.sflag [#allocation4], %s225
        %s227 = sand.u32 %s35, 1
        %s228 = smul.addr %s227, 8
        %s229 = scalar_lea.vmem [#allocation3], %s228
        %p230 = pneg %p48
        %p231 = pneg %p45
        %p232 = pneg %p69
        %p233 = pneg %p66
        %p234 = pneg %p90
        %p235 = pneg %p87
        %p236 = pneg %p116
        %p237 = pneg %p113
        %s238 = sand.u32 %s103, 1
        %s239 = scalar_lea.sflag [#allocation5], %s238
        %s240 = sand.u32 %s103, 1
        %s241 = smul.addr %s240, 8
        %s242 = scalar_lea.vmem [#allocation10], %s241
        %p243 = pneg %p142
        %p244 = pneg %p139
        %s245 = sand.u32 %s129, 1
        %s246 = scalar_lea.sflag [#allocation12], %s245
        %s247 = sand.u32 %s129, 1
        %s248 = smul.addr %s247, 2
        %s249 = scalar_lea.vmem [#allocation11], %s248
        %v250 = vlaneseq
        %v251 = vand.u32 %v250, 127
        %vm252 = vcmp.lt.s32.totalorder %v251, 0
        %v253 = vsub.s32 0, %v251
        %v254 = vsel %vm252, %v253, %v251
        %v255 = vshrl.u32 %v254, 4
        %v256 = vand.u32 %v254, 15
        %v257 = vsub.s32 0, %v256
        %v258 = vsel %vm252, %v257, %v256
        %vm259 = vcmp.ne.s32.totalorder %v258, 0
        %vm260 = vcmp.lt.s32.totalorder %v258, 0
        %vm261 = vmand %vm260, %vm259
        %v262 = vadd.s32 %v258, 16
        %v263 = vsel %vm261, %v262, %v258
        %vm264 = vcmp.gt.s32.totalorder %v263, 0
        %vm265 = vcmp.lt.s32.totalorder %v263, 15
        %vm266 = vcmp.lt.s32.totalorder %v251, 16
        %vm267 = vcmp.ge.s32.totalorder %v251, 112
        %268 = vst [vmem:[#allocation2] sm:$0xf] 0.0
        %s269 = sld [smem:[#allocation8]]
        %v270 = vstv %s269
        %s271 = sld [smem:[#allocation8 + $0x1]]
        %v272 = vstv %s271
        %s273 = sld [smem:[#allocation8 + $0x2]]
        %v274 = vstv %s273
        %s275 = sld [smem:[#allocation8 + $0x3]]
        %v276 = vstv %s275
        %s277 = sld [smem:[#allocation8 + $0x4]]
        %v278 = vstv %s277
        %v279 = vld [vmem:[%s211] sm:$0x3]
        %280 = vst [vmem:[#allocation2 + $0x1] sm:$0x3] %v279
        %v281 = vld [vmem:[#allocation2] sm:$0x3]
        %v282 = vld [vmem:[#allocation2 + $0x2] sm:$0x3]
        %283 = vrot.lane.b32.xlu0 %v281, 16
        %v284 = vpop.permute.xlu0 %283
        %285 = vrot.lane.b32.xlu0 %v279, 16
        %v286 = vpop.permute.xlu0 %285
        %v287 = vsel %vm266, %v284, %v286
        %288 = vrot.lane.b32.xlu0 %v282, 112
        %v289 = vpop.permute.xlu0 %288
        %290 = vrot.lane.b32.xlu0 %v279, 112
        %v291 = vpop.permute.xlu0 %290
        %v292 = vsel %vm267, %v289, %v291
        %293 = vrot.lane.b32.xlu0 %v287, 1
        %v294 = vpop.permute.xlu0 %293
        %v295 = vsel %vm264, %v294, 0.0
        %296 = vrot.lane.b32.xlu0 %v287, 127
        %v297 = vpop.permute.xlu0 %296
        %v298 = vsel %vm265, %v297, 0.0
        %299 = vrot.lane.b32.xlu0 %v279, 1
        %v300 = vpop.permute.xlu0 %299
        %v301 = vsel %vm264, %v300, 0.0
        %302 = vrot.lane.b32.xlu0 %v279, 127
        %v303 = vpop.permute.xlu0 %302
        %v304 = vsel %vm265, %v303, 0.0
        %305 = vrot.lane.b32.xlu0 %v292, 1
        %v306 = vpop.permute.xlu0 %305
        %v307 = vsel %vm264, %v306, 0.0
        %308 = vrot.lane.b32.xlu0 %v292, 127
        %v309 = vpop.permute.xlu0 %308
        %v310 = vsel %vm265, %v309, 0.0
        %s311 = sld [smem:[#allocation7]]
        %v312 = vstv %s311
        %v313 = vmul.f32 %v312, %v295
        %v314 = vadd.f32 %v270, %v313
        %s315 = sld [smem:[#allocation7 + $0x1]]
        %v316 = vstv %s315
        %v317 = vmul.f32 %v316, %v287
        %v318 = vadd.f32 %v314, %v317
        %s319 = sld [smem:[#allocation7 + $0x2]]
        %v320 = vstv %s319
        %v321 = vmul.f32 %v320, %v298
        %v322 = vadd.f32 %v318, %v321
        %s323 = sld [smem:[#allocation7 + $0x3]]
        %v324 = vstv %s323
        %v325 = vmul.f32 %v324, %v301
        %v326 = vadd.f32 %v322, %v325
        %s327 = sld [smem:[#allocation7 + $0x4]]
        %v328 = vstv %s327
        %v329 = vmul.f32 %v328, %v279
        %v330 = vadd.f32 %v326, %v329
        %s331 = sld [smem:[#allocation7 + $0x5]]
        %v332 = vstv %s331
        %v333 = vmul.f32 %v332, %v304
        %v334 = vadd.f32 %v330, %v333
        %s335 = sld [smem:[#allocation7 + $0x6]]
        %v336 = vstv %s335
        %v337 = vmul.f32 %v336, %v307
        %v338 = vadd.f32 %v334, %v337
        %s339 = sld [smem:[#allocation7 + $0x7]]
        %v340 = vstv %s339
        %v341 = vmul.f32 %v340, %v292
        %v342 = vadd.f32 %v338, %v341
        %s343 = sld [smem:[#allocation7 + $0x8]]
        %v344 = vstv %s343
        %v345 = vmul.f32 %v344, %v310
        %v346 = vadd.f32 %v342, %v345
        %s347 = sld [smem:[#allocation7 + $0x24]]
        %v348 = vstv %s347
        %v349 = vmul.f32 %v348, %v295
        %v350 = vadd.f32 %v272, %v349
        %s351 = sld [smem:[#allocation7 + $0x25]]
        %v352 = vstv %s351
        %v353 = vmul.f32 %v352, %v287
        %v354 = vadd.f32 %v350, %v353
        %s355 = sld [smem:[#allocation7 + $0x26]]
        %v356 = vstv %s355
        %v357 = vmul.f32 %v356, %v298
        %v358 = vadd.f32 %v354, %v357
        %s359 = sld [smem:[#allocation7 + $0x27]]
        %v360 = vstv %s359
        %v361 = vmul.f32 %v360, %v301
        %v362 = vadd.f32 %v358, %v361
        %s363 = sld [smem:[#allocation7 + $0x28]]
        %v364 = vstv %s363
        %v365 = vmul.f32 %v364, %v279
        %v366 = vadd.f32 %v362, %v365
        %s367 = sld [smem:[#allocation7 + $0x29]]
        %v368 = vstv %s367
        %v369 = vmul.f32 %v368, %v304
        %v370 = vadd.f32 %v366, %v369
        %s371 = sld [smem:[#allocation7 + $0x2a]]
        %v372 = vstv %s371
        %v373 = vmul.f32 %v372, %v307
        %v374 = vadd.f32 %v370, %v373
        %s375 = sld [smem:[#allocation7 + $0x2b]]
        %v376 = vstv %s375
        %v377 = vmul.f32 %v376, %v292
        %v378 = vadd.f32 %v374, %v377
        %s379 = sld [smem:[#allocation7 + $0x2c]]
        %v380 = vstv %s379
        %v381 = vmul.f32 %v380, %v310
        %v382 = vadd.f32 %v378, %v381
        %s383 = sld [smem:[#allocation7 + $0x48]]
        %v384 = vstv %s383
        %v385 = vmul.f32 %v384, %v295
        %v386 = vadd.f32 %v274, %v385
        %s387 = sld [smem:[#allocation7 + $0x49]]
        %v388 = vstv %s387
        %v389 = vmul.f32 %v388, %v287
        %v390 = vadd.f32 %v386, %v389
        %s391 = sld [smem:[#allocation7 + $0x4a]]
        %v392 = vstv %s391
        %v393 = vmul.f32 %v392, %v298
        %v394 = vadd.f32 %v390, %v393
        %s395 = sld [smem:[#allocation7 + $0x4b]]
        %v396 = vstv %s395
        %v397 = vmul.f32 %v396, %v301
        %v398 = vadd.f32 %v394, %v397
        %s399 = sld [smem:[#allocation7 + $0x4c]]
        %v400 = vstv %s399
        %v401 = vmul.f32 %v400, %v279
        %v402 = vadd.f32 %v398, %v401
        %s403 = sld [smem:[#allocation7 + $0x4d]]
        %v404 = vstv %s403
        %v405 = vmul.f32 %v404, %v304
        %v406 = vadd.f32 %v402, %v405
        %s407 = sld [smem:[#allocation7 + $0x4e]]
        %v408 = vstv %s407
        %v409 = vmul.f32 %v408, %v307
        %v410 = vadd.f32 %v406, %v409
        %s411 = sld [smem:[#allocation7 + $0x4f]]
        %v412 = vstv %s411
        %v413 = vmul.f32 %v412, %v292
        %v414 = vadd.f32 %v410, %v413
        %s415 = sld [smem:[#allocation7 + $0x50]]
        %v416 = vstv %s415
        %v417 = vmul.f32 %v416, %v310
        %v418 = vadd.f32 %v414, %v417
        %s419 = sld [smem:[#allocation7 + $0x6c]]
        %v420 = vstv %s419
        %v421 = vmul.f32 %v420, %v295
        %v422 = vadd.f32 %v276, %v421
        %s423 = sld [smem:[#allocation7 + $0x6d]]
        %v424 = vstv %s423
        %v425 = vmul.f32 %v424, %v287
        %v426 = vadd.f32 %v422, %v425
        %s427 = sld [smem:[#allocation7 + $0x6e]]
        %v428 = vstv %s427
        %v429 = vmul.f32 %v428, %v298
        %v430 = vadd.f32 %v426, %v429
        %s431 = sld [smem:[#allocation7 + $0x6f]]
        %v432 = vstv %s431
        %v433 = vmul.f32 %v432, %v301
        %v434 = vadd.f32 %v430, %v433
        %s435 = sld [smem:[#allocation7 + $0x70]]
        %v436 = vstv %s435
        %v437 = vmul.f32 %v436, %v279
        %v438 = vadd.f32 %v434, %v437
        %s439 = sld [smem:[#allocation7 + $0x71]]
        %v440 = vstv %s439
        %v441 = vmul.f32 %v440, %v304
        %v442 = vadd.f32 %v438, %v441
        %s443 = sld [smem:[#allocation7 + $0x72]]
        %v444 = vstv %s443
        %v445 = vmul.f32 %v444, %v307
        %v446 = vadd.f32 %v442, %v445
        %s447 = sld [smem:[#allocation7 + $0x73]]
        %v448 = vstv %s447
        %v449 = vmul.f32 %v448, %v292
        %v450 = vadd.f32 %v446, %v449
        %s451 = sld [smem:[#allocation7 + $0x74]]
        %v452 = vstv %s451
        %v453 = vmul.f32 %v452, %v310
        %v454 = vadd.f32 %v450, %v453
        %s455 = sld [smem:[#allocation7 + $0x90]]
        %v456 = vstv %s455
        %v457 = vmul.f32 %v456, %v295
        %v458 = vadd.f32 %v278, %v457
        %s459 = sld [smem:[#allocation7 + $0x91]]
        %v460 = vstv %s459
        %v461 = vmul.f32 %v460, %v287
        %v462 = vadd.f32 %v458, %v461
        %s463 = sld [smem:[#allocation7 + $0x92]]
        %v464 = vstv %s463
        %v465 = vmul.f32 %v464, %v298
        %v466 = vadd.f32 %v462, %v465
        %s467 = sld [smem:[#allocation7 + $0x93]]
        %v468 = vstv %s467
        %v469 = vmul.f32 %v468, %v301
        %v470 = vadd.f32 %v466, %v469
        %s471 = sld [smem:[#allocation7 + $0x94]]
        %v472 = vstv %s471
        %v473 = vmul.f32 %v472, %v279
        %v474 = vadd.f32 %v470, %v473
        %s475 = sld [smem:[#allocation7 + $0x95]]
        %v476 = vstv %s475
        %v477 = vmul.f32 %v476, %v304
        %v478 = vadd.f32 %v474, %v477
        %s479 = sld [smem:[#allocation7 + $0x96]]
        %v480 = vstv %s479
        %v481 = vmul.f32 %v480, %v307
        %v482 = vadd.f32 %v478, %v481
        %s483 = sld [smem:[#allocation7 + $0x97]]
        %v484 = vstv %s483
        %v485 = vmul.f32 %v484, %v292
        %v486 = vadd.f32 %v482, %v485
        %s487 = sld [smem:[#allocation7 + $0x98]]
        %v488 = vstv %s487
        %v489 = vmul.f32 %v488, %v310
        %v490 = vadd.f32 %v486, %v489
        %s491 = scalar_lea.vmem %s211, 2 [#allocation3]
        %v492 = vld [vmem:[%s491] sm:$0x3]
        %493 = vst [vmem:[#allocation2 + $0x1] sm:$0x3] %v492
        %v494 = vld [vmem:[#allocation2] sm:$0x3]
        %v495 = vld [vmem:[#allocation2 + $0x2] sm:$0x3]
        %496 = vrot.lane.b32.xlu0 %v494, 16
        %v497 = vpop.permute.xlu0 %496
        %498 = vrot.lane.b32.xlu0 %v492, 16
        %v499 = vpop.permute.xlu0 %498
        %v500 = vsel %vm266, %v497, %v499
        %501 = vrot.lane.b32.xlu0 %v495, 112
        %v502 = vpop.permute.xlu0 %501
        %503 = vrot.lane.b32.xlu0 %v492, 112
        %v504 = vpop.permute.xlu0 %503
        %v505 = vsel %vm267, %v502, %v504
        %506 = vrot.lane.b32.xlu0 %v500, 1
        %v507 = vpop.permute.xlu0 %506
        %v508 = vsel %vm264, %v507, 0.0
        %509 = vrot.lane.b32.xlu0 %v500, 127
        %v510 = vpop.permute.xlu0 %509
        %v511 = vsel %vm265, %v510, 0.0
        %512 = vrot.lane.b32.xlu0 %v492, 1
        %v513 = vpop.permute.xlu0 %512
        %v514 = vsel %vm264, %v513, 0.0
        %515 = vrot.lane.b32.xlu0 %v492, 127
        %v516 = vpop.permute.xlu0 %515
        %v517 = vsel %vm265, %v516, 0.0
        %518 = vrot.lane.b32.xlu0 %v505, 1
        %v519 = vpop.permute.xlu0 %518
        %v520 = vsel %vm264, %v519, 0.0
        %521 = vrot.lane.b32.xlu0 %v505, 127
        %v522 = vpop.permute.xlu0 %521
        %v523 = vsel %vm265, %v522, 0.0
        %s524 = sld [smem:[#allocation7 + $0x9]]
        %v525 = vstv %s524
        %v526 = vmul.f32 %v525, %v508
        %v527 = vadd.f32 %v346, %v526
        %s528 = sld [smem:[#allocation7 + $0xa]]
        %v529 = vstv %s528
        %v530 = vmul.f32 %v529, %v500
        %v531 = vadd.f32 %v527, %v530
        %s532 = sld [smem:[#allocation7 + $0xb]]
        %v533 = vstv %s532
        %v534 = vmul.f32 %v533, %v511
        %v535 = vadd.f32 %v531, %v534
        %s536 = sld [smem:[#allocation7 + $0xc]]
        %v537 = vstv %s536
        %v538 = vmul.f32 %v537, %v514
        %v539 = vadd.f32 %v535, %v538
        %s540 = sld [smem:[#allocation7 + $0xd]]
        %v541 = vstv %s540
        %v542 = vmul.f32 %v541, %v492
        %v543 = vadd.f32 %v539, %v542
        %s544 = sld [smem:[#allocation7 + $0xe]]
        %v545 = vstv %s544
        %v546 = vmul.f32 %v545, %v517
        %v547 = vadd.f32 %v543, %v546
        %s548 = sld [smem:[#allocation7 + $0xf]]
        %v549 = vstv %s548
        %v550 = vmul.f32 %v549, %v520
        %v551 = vadd.f32 %v547, %v550
        %s552 = sld [smem:[#allocation7 + $0x10]]
        %v553 = vstv %s552
        %v554 = vmul.f32 %v553, %v505
        %v555 = vadd.f32 %v551, %v554
        %s556 = sld [smem:[#allocation7 + $0x11]]
        %v557 = vstv %s556
        %v558 = vmul.f32 %v557, %v523
        %v559 = vadd.f32 %v555, %v558
        %s560 = sld [smem:[#allocation7 + $0x2d]]
        %v561 = vstv %s560
        %v562 = vmul.f32 %v561, %v508
        %v563 = vadd.f32 %v382, %v562
        %s564 = sld [smem:[#allocation7 + $0x2e]]
        %v565 = vstv %s564
        %v566 = vmul.f32 %v565, %v500
        %v567 = vadd.f32 %v563, %v566
        %s568 = sld [smem:[#allocation7 + $0x2f]]
        %v569 = vstv %s568
        %v570 = vmul.f32 %v569, %v511
        %v571 = vadd.f32 %v567, %v570
        %s572 = sld [smem:[#allocation7 + $0x30]]
        %v573 = vstv %s572
        %v574 = vmul.f32 %v573, %v514
        %v575 = vadd.f32 %v571, %v574
        %s576 = sld [smem:[#allocation7 + $0x31]]
        %v577 = vstv %s576
        %v578 = vmul.f32 %v577, %v492
        %v579 = vadd.f32 %v575, %v578
        %s580 = sld [smem:[#allocation7 + $0x32]]
        %v581 = vstv %s580
        %v582 = vmul.f32 %v581, %v517
        %v583 = vadd.f32 %v579, %v582
        %s584 = sld [smem:[#allocation7 + $0x33]]
        %v585 = vstv %s584
        %v586 = vmul.f32 %v585, %v520
        %v587 = vadd.f32 %v583, %v586
        %s588 = sld [smem:[#allocation7 + $0x34]]
        %v589 = vstv %s588
        %v590 = vmul.f32 %v589, %v505
        %v591 = vadd.f32 %v587, %v590
        %s592 = sld [smem:[#allocation7 + $0x35]]
        %v593 = vstv %s592
        %v594 = vmul.f32 %v593, %v523
        %v595 = vadd.f32 %v591, %v594
        %s596 = sld [smem:[#allocation7 + $0x51]]
        %v597 = vstv %s596
        %v598 = vmul.f32 %v597, %v508
        %v599 = vadd.f32 %v418, %v598
        %s600 = sld [smem:[#allocation7 + $0x52]]
        %v601 = vstv %s600
        %v602 = vmul.f32 %v601, %v500
        %v603 = vadd.f32 %v599, %v602
        %s604 = sld [smem:[#allocation7 + $0x53]]
        %v605 = vstv %s604
        %v606 = vmul.f32 %v605, %v511
        %v607 = vadd.f32 %v603, %v606
        %s608 = sld [smem:[#allocation7 + $0x54]]
        %v609 = vstv %s608
        %v610 = vmul.f32 %v609, %v514
        %v611 = vadd.f32 %v607, %v610
        %s612 = sld [smem:[#allocation7 + $0x55]]
        %v613 = vstv %s612
        %v614 = vmul.f32 %v613, %v492
        %v615 = vadd.f32 %v611, %v614
        %s616 = sld [smem:[#allocation7 + $0x56]]
        %v617 = vstv %s616
        %v618 = vmul.f32 %v617, %v517
        %v619 = vadd.f32 %v615, %v618
        %s620 = sld [smem:[#allocation7 + $0x57]]
        %v621 = vstv %s620
        %v622 = vmul.f32 %v621, %v520
        %v623 = vadd.f32 %v619, %v622
        %s624 = sld [smem:[#allocation7 + $0x58]]
        %v625 = vstv %s624
        %v626 = vmul.f32 %v625, %v505
        %v627 = vadd.f32 %v623, %v626
        %s628 = sld [smem:[#allocation7 + $0x59]]
        %v629 = vstv %s628
        %v630 = vmul.f32 %v629, %v523
        %v631 = vadd.f32 %v627, %v630
        %s632 = sld [smem:[#allocation7 + $0x75]]
        %v633 = vstv %s632
        %v634 = vmul.f32 %v633, %v508
        %v635 = vadd.f32 %v454, %v634
        %s636 = sld [smem:[#allocation7 + $0x76]]
        %v637 = vstv %s636
        %v638 = vmul.f32 %v637, %v500
        %v639 = vadd.f32 %v635, %v638
        %s640 = sld [smem:[#allocation7 + $0x77]]
        %v641 = vstv %s640
        %v642 = vmul.f32 %v641, %v511
        %v643 = vadd.f32 %v639, %v642
        %s644 = sld [smem:[#allocation7 + $0x78]]
        %v645 = vstv %s644
        %v646 = vmul.f32 %v645, %v514
        %v647 = vadd.f32 %v643, %v646
        %s648 = sld [smem:[#allocation7 + $0x79]]
        %v649 = vstv %s648
        %v650 = vmul.f32 %v649, %v492
        %v651 = vadd.f32 %v647, %v650
        %s652 = sld [smem:[#allocation7 + $0x7a]]
        %v653 = vstv %s652
        %v654 = vmul.f32 %v653, %v517
        %v655 = vadd.f32 %v651, %v654
        %s656 = sld [smem:[#allocation7 + $0x7b]]
        %v657 = vstv %s656
        %v658 = vmul.f32 %v657, %v520
        %v659 = vadd.f32 %v655, %v658
        %s660 = sld [smem:[#allocation7 + $0x7c]]
        %v661 = vstv %s660
        %v662 = vmul.f32 %v661, %v505
        %v663 = vadd.f32 %v659, %v662
        %s664 = sld [smem:[#allocation7 + $0x7d]]
        %v665 = vstv %s664
        %v666 = vmul.f32 %v665, %v523
        %v667 = vadd.f32 %v663, %v666
        %s668 = sld [smem:[#allocation7 + $0x99]]
        %v669 = vstv %s668
        %v670 = vmul.f32 %v669, %v508
        %v671 = vadd.f32 %v490, %v670
        %s672 = sld [smem:[#allocation7 + $0x9a]]
        %v673 = vstv %s672
        %v674 = vmul.f32 %v673, %v500
        %v675 = vadd.f32 %v671, %v674
        %s676 = sld [smem:[#allocation7 + $0x9b]]
        %v677 = vstv %s676
        %v678 = vmul.f32 %v677, %v511
        %v679 = vadd.f32 %v675, %v678
        %s680 = sld [smem:[#allocation7 + $0x9c]]
        %v681 = vstv %s680
        %v682 = vmul.f32 %v681, %v514
        %v683 = vadd.f32 %v679, %v682
        %s684 = sld [smem:[#allocation7 + $0x9d]]
        %v685 = vstv %s684
        %v686 = vmul.f32 %v685, %v492
        %v687 = vadd.f32 %v683, %v686
        %s688 = sld [smem:[#allocation7 + $0x9e]]
        %v689 = vstv %s688
        %v690 = vmul.f32 %v689, %v517
        %v691 = vadd.f32 %v687, %v690
        %s692 = sld [smem:[#allocation7 + $0x9f]]
        %v693 = vstv %s692
        %v694 = vmul.f32 %v693, %v520
        %v695 = vadd.f32 %v691, %v694
        %s696 = sld [smem:[#allocation7 + $0xa0]]
        %v697 = vstv %s696
        %v698 = vmul.f32 %v697, %v505
        %v699 = vadd.f32 %v695, %v698
        %s700 = sld [smem:[#allocation7 + $0xa1]]
        %v701 = vstv %s700
        %v702 = vmul.f32 %v701, %v523
        %v703 = vadd.f32 %v699, %v702
        %s704 = scalar_lea.vmem %s211, 4 [#allocation3]
        %v705 = vld [vmem:[%s704] sm:$0x3]
        %706 = vst [vmem:[#allocation2 + $0x1] sm:$0x3] %v705
        %v707 = vld [vmem:[#allocation2] sm:$0x3]
        %v708 = vld [vmem:[#allocation2 + $0x2] sm:$0x3]
        %709 = vrot.lane.b32.xlu0 %v707, 16
        %v710 = vpop.permute.xlu0 %709
        %711 = vrot.lane.b32.xlu0 %v705, 16
        %v712 = vpop.permute.xlu0 %711
        %v713 = vsel %vm266, %v710, %v712
        %714 = vrot.lane.b32.xlu0 %v708, 112
        %v715 = vpop.permute.xlu0 %714
        %716 = vrot.lane.b32.xlu0 %v705, 112
        %v717 = vpop.permute.xlu0 %716
        %v718 = vsel %vm267, %v715, %v717
        %719 = vrot.lane.b32.xlu0 %v713, 1
        %v720 = vpop.permute.xlu0 %719
        %v721 = vsel %vm264, %v720, 0.0
        %722 = vrot.lane.b32.xlu0 %v713, 127
        %v723 = vpop.permute.xlu0 %722
        %v724 = vsel %vm265, %v723, 0.0
        %725 = vrot.lane.b32.xlu0 %v705, 1
        %v726 = vpop.permute.xlu0 %725
        %v727 = vsel %vm264, %v726, 0.0
        %728 = vrot.lane.b32.xlu0 %v705, 127
        %v729 = vpop.permute.xlu0 %728
        %v730 = vsel %vm265, %v729, 0.0
        %731 = vrot.lane.b32.xlu0 %v718, 1
        %v732 = vpop.permute.xlu0 %731
        %v733 = vsel %vm264, %v732, 0.0
        %734 = vrot.lane.b32.xlu0 %v718, 127
        %v735 = vpop.permute.xlu0 %734
        %v736 = vsel %vm265, %v735, 0.0
        %s737 = sld [smem:[#allocation7 + $0x12]]
        %v738 = vstv %s737
        %v739 = vmul.f32 %v738, %v721
        %v740 = vadd.f32 %v559, %v739
        %s741 = sld [smem:[#allocation7 + $0x13]]
        %v742 = vstv %s741
        %v743 = vmul.f32 %v742, %v713
        %v744 = vadd.f32 %v740, %v743
        %s745 = sld [smem:[#allocation7 + $0x14]]
        %v746 = vstv %s745
        %v747 = vmul.f32 %v746, %v724
        %v748 = vadd.f32 %v744, %v747
        %s749 = sld [smem:[#allocation7 + $0x15]]
        %v750 = vstv %s749
        %v751 = vmul.f32 %v750, %v727
        %v752 = vadd.f32 %v748, %v751
        %s753 = sld [smem:[#allocation7 + $0x16]]
        %v754 = vstv %s753
        %v755 = vmul.f32 %v754, %v705
        %v756 = vadd.f32 %v752, %v755
        %s757 = sld [smem:[#allocation7 + $0x17]]
        %v758 = vstv %s757
        %v759 = vmul.f32 %v758, %v730
        %v760 = vadd.f32 %v756, %v759
        %s761 = sld [smem:[#allocation7 + $0x18]]
        %v762 = vstv %s761
        %v763 = vmul.f32 %v762, %v733
        %v764 = vadd.f32 %v760, %v763
        %s765 = sld [smem:[#allocation7 + $0x19]]
        %v766 = vstv %s765
        %v767 = vmul.f32 %v766, %v718
        %v768 = vadd.f32 %v764, %v767
        %s769 = sld [smem:[#allocation7 + $0x1a]]
        %v770 = vstv %s769
        %v771 = vmul.f32 %v770, %v736
        %v772 = vadd.f32 %v768, %v771
        %s773 = sld [smem:[#allocation7 + $0x36]]
        %v774 = vstv %s773
        %v775 = vmul.f32 %v774, %v721
        %v776 = vadd.f32 %v595, %v775
        %s777 = sld [smem:[#allocation7 + $0x37]]
        %v778 = vstv %s777
        %v779 = vmul.f32 %v778, %v713
        %v780 = vadd.f32 %v776, %v779
        %s781 = sld [smem:[#allocation7 + $0x38]]
        %v782 = vstv %s781
        %v783 = vmul.f32 %v782, %v724
        %v784 = vadd.f32 %v780, %v783
        %s785 = sld [smem:[#allocation7 + $0x39]]
        %v786 = vstv %s785
        %v787 = vmul.f32 %v786, %v727
        %v788 = vadd.f32 %v784, %v787
        %s789 = sld [smem:[#allocation7 + $0x3a]]
        %v790 = vstv %s789
        %v791 = vmul.f32 %v790, %v705
        %v792 = vadd.f32 %v788, %v791
        %s793 = sld [smem:[#allocation7 + $0x3b]]
        %v794 = vstv %s793
        %v795 = vmul.f32 %v794, %v730
        %v796 = vadd.f32 %v792, %v795
        %s797 = sld [smem:[#allocation7 + $0x3c]]
        %v798 = vstv %s797
        %v799 = vmul.f32 %v798, %v733
        %v800 = vadd.f32 %v796, %v799
        %s801 = sld [smem:[#allocation7 + $0x3d]]
        %v802 = vstv %s801
        %v803 = vmul.f32 %v802, %v718
        %v804 = vadd.f32 %v800, %v803
        %s805 = sld [smem:[#allocation7 + $0x3e]]
        %v806 = vstv %s805
        %v807 = vmul.f32 %v806, %v736
        %v808 = vadd.f32 %v804, %v807
        %s809 = sld [smem:[#allocation7 + $0x5a]]
        %v810 = vstv %s809
        %v811 = vmul.f32 %v810, %v721
        %v812 = vadd.f32 %v631, %v811
        %s813 = sld [smem:[#allocation7 + $0x5b]]
        %v814 = vstv %s813
        %v815 = vmul.f32 %v814, %v713
        %v816 = vadd.f32 %v812, %v815
        %s817 = sld [smem:[#allocation7 + $0x5c]]
        %v818 = vstv %s817
        %v819 = vmul.f32 %v818, %v724
        %v820 = vadd.f32 %v816, %v819
        %s821 = sld [smem:[#allocation7 + $0x5d]]
        %v822 = vstv %s821
        %v823 = vmul.f32 %v822, %v727
        %v824 = vadd.f32 %v820, %v823
        %s825 = sld [smem:[#allocation7 + $0x5e]]
        %v826 = vstv %s825
        %v827 = vmul.f32 %v826, %v705
        %v828 = vadd.f32 %v824, %v827
        %s829 = sld [smem:[#allocation7 + $0x5f]]
        %v830 = vstv %s829
        %v831 = vmul.f32 %v830, %v730
        %v832 = vadd.f32 %v828, %v831
        %s833 = sld [smem:[#allocation7 + $0x60]]
        %v834 = vstv %s833
        %v835 = vmul.f32 %v834, %v733
        %v836 = vadd.f32 %v832, %v835
        %s837 = sld [smem:[#allocation7 + $0x61]]
        %v838 = vstv %s837
        %v839 = vmul.f32 %v838, %v718
        %v840 = vadd.f32 %v836, %v839
        %s841 = sld [smem:[#allocation7 + $0x62]]
        %v842 = vstv %s841
        %v843 = vmul.f32 %v842, %v736
        %v844 = vadd.f32 %v840, %v843
        %s845 = sld [smem:[#allocation7 + $0x7e]]
        %v846 = vstv %s845
        %v847 = vmul.f32 %v846, %v721
        %v848 = vadd.f32 %v667, %v847
        %s849 = sld [smem:[#allocation7 + $0x7f]]
        %v850 = vstv %s849
        %v851 = vmul.f32 %v850, %v713
        %v852 = vadd.f32 %v848, %v851
        %s853 = sld [smem:[#allocation7 + $0x80]]
        %v854 = vstv %s853
        %v855 = vmul.f32 %v854, %v724
        %v856 = vadd.f32 %v852, %v855
        %s857 = sld [smem:[#allocation7 + $0x81]]
        %v858 = vstv %s857
        %v859 = vmul.f32 %v858, %v727
        %v860 = vadd.f32 %v856, %v859
        %s861 = sld [smem:[#allocation7 + $0x82]]
        %v862 = vstv %s861
        %v863 = vmul.f32 %v862, %v705
        %v864 = vadd.f32 %v860, %v863
        %s865 = sld [smem:[#allocation7 + $0x83]]
        %v866 = vstv %s865
        %v867 = vmul.f32 %v866, %v730
        %v868 = vadd.f32 %v864, %v867
        %s869 = sld [smem:[#allocation7 + $0x84]]
        %v870 = vstv %s869
        %v871 = vmul.f32 %v870, %v733
        %v872 = vadd.f32 %v868, %v871
        %s873 = sld [smem:[#allocation7 + $0x85]]
        %v874 = vstv %s873
        %v875 = vmul.f32 %v874, %v718
        %v876 = vadd.f32 %v872, %v875
        %s877 = sld [smem:[#allocation7 + $0x86]]
        %v878 = vstv %s877
        %v879 = vmul.f32 %v878, %v736
        %v880 = vadd.f32 %v876, %v879
        %s881 = sld [smem:[#allocation7 + $0xa2]]
        %v882 = vstv %s881
        %v883 = vmul.f32 %v882, %v721
        %v884 = vadd.f32 %v703, %v883
        %s885 = sld [smem:[#allocation7 + $0xa3]]
        %v886 = vstv %s885
        %v887 = vmul.f32 %v886, %v713
        %v888 = vadd.f32 %v884, %v887
        %s889 = sld [smem:[#allocation7 + $0xa4]]
        %v890 = vstv %s889
        %v891 = vmul.f32 %v890, %v724
        %v892 = vadd.f32 %v888, %v891
        %s893 = sld [smem:[#allocation7 + $0xa5]]
        %v894 = vstv %s893
        %v895 = vmul.f32 %v894, %v727
        %v896 = vadd.f32 %v892, %v895
        %s897 = sld [smem:[#allocation7 + $0xa6]]
        %v898 = vstv %s897
        %v899 = vmul.f32 %v898, %v705
        %v900 = vadd.f32 %v896, %v899
        %s901 = sld [smem:[#allocation7 + $0xa7]]
        %v902 = vstv %s901
        %v903 = vmul.f32 %v902, %v730
        %v904 = vadd.f32 %v900, %v903
        %s905 = sld [smem:[#allocation7 + $0xa8]]
        %v906 = vstv %s905
        %v907 = vmul.f32 %v906, %v733
        %v908 = vadd.f32 %v904, %v907
        %s909 = sld [smem:[#allocation7 + $0xa9]]
        %v910 = vstv %s909
        %v911 = vmul.f32 %v910, %v718
        %v912 = vadd.f32 %v908, %v911
        %s913 = sld [smem:[#allocation7 + $0xaa]]
        %v914 = vstv %s913
        %v915 = vmul.f32 %v914, %v736
        %v916 = vadd.f32 %v912, %v915
        %s917 = scalar_lea.vmem %s211, 6 [#allocation3]
        %v918 = vld [vmem:[%s917] sm:$0x3]
        %919 = vst [vmem:[#allocation2 + $0x1] sm:$0x3] %v918
        %v920 = vld [vmem:[#allocation2] sm:$0x3]
        %v921 = vld [vmem:[#allocation2 + $0x2] sm:$0x3]
        %922 = vrot.lane.b32.xlu0 %v920, 16
        %v923 = vpop.permute.xlu0 %922
        %924 = vrot.lane.b32.xlu0 %v918, 16
        %v925 = vpop.permute.xlu0 %924
        %v926 = vsel %vm266, %v923, %v925
        %927 = vrot.lane.b32.xlu0 %v921, 112
        %v928 = vpop.permute.xlu0 %927
        %929 = vrot.lane.b32.xlu0 %v918, 112
        %v930 = vpop.permute.xlu0 %929
        %v931 = vsel %vm267, %v928, %v930
        %932 = vrot.lane.b32.xlu0 %v926, 1
        %v933 = vpop.permute.xlu0 %932
        %v934 = vsel %vm264, %v933, 0.0
        %935 = vrot.lane.b32.xlu0 %v926, 127
        %v936 = vpop.permute.xlu0 %935
        %v937 = vsel %vm265, %v936, 0.0
        %938 = vrot.lane.b32.xlu0 %v918, 1
        %v939 = vpop.permute.xlu0 %938
        %v940 = vsel %vm264, %v939, 0.0
        %941 = vrot.lane.b32.xlu0 %v918, 127
        %v942 = vpop.permute.xlu0 %941
        %v943 = vsel %vm265, %v942, 0.0
        %944 = vrot.lane.b32.xlu0 %v931, 1
        %v945 = vpop.permute.xlu0 %944
        %v946 = vsel %vm264, %v945, 0.0
        %947 = vrot.lane.b32.xlu0 %v931, 127
        %v948 = vpop.permute.xlu0 %947
        %v949 = vsel %vm265, %v948, 0.0
        %s950 = sld [smem:[#allocation7 + $0x1b]]
        %v951 = vstv %s950
        %v952 = vmul.f32 %v951, %v934
        %v953 = vadd.f32 %v772, %v952
        %s954 = sld [smem:[#allocation7 + $0x1c]]
        %v955 = vstv %s954
        %v956 = vmul.f32 %v955, %v926
        %v957 = vadd.f32 %v953, %v956
        %s958 = sld [smem:[#allocation7 + $0x1d]]
        %v959 = vstv %s958
        %v960 = vmul.f32 %v959, %v937
        %v961 = vadd.f32 %v957, %v960
        %s962 = sld [smem:[#allocation7 + $0x1e]]
        %v963 = vstv %s962
        %v964 = vmul.f32 %v963, %v940
        %v965 = vadd.f32 %v961, %v964
        %s966 = sld [smem:[#allocation7 + $0x1f]]
        %v967 = vstv %s966
        %v968 = vmul.f32 %v967, %v918
        %v969 = vadd.f32 %v965, %v968
        %s970 = sld [smem:[#allocation7 + $0x20]]
        %v971 = vstv %s970
        %v972 = vmul.f32 %v971, %v943
        %v973 = vadd.f32 %v969, %v972
        %s974 = sld [smem:[#allocation7 + $0x21]]
        %v975 = vstv %s974
        %v976 = vmul.f32 %v975, %v946
        %v977 = vadd.f32 %v973, %v976
        %s978 = sld [smem:[#allocation7 + $0x22]]
        %v979 = vstv %s978
        %v980 = vmul.f32 %v979, %v931
        %v981 = vadd.f32 %v977, %v980
        %s982 = sld [smem:[#allocation7 + $0x23]]
        %v983 = vstv %s982
        %v984 = vmul.f32 %v983, %v949
        %v985 = vadd.f32 %v981, %v984
        %s986 = sld [smem:[#allocation7 + $0x3f]]
        %v987 = vstv %s986
        %v988 = vmul.f32 %v987, %v934
        %v989 = vadd.f32 %v808, %v988
        %s990 = sld [smem:[#allocation7 + $0x40]]
        %v991 = vstv %s990
        %v992 = vmul.f32 %v991, %v926
        %v993 = vadd.f32 %v989, %v992
        %s994 = sld [smem:[#allocation7 + $0x41]]
        %v995 = vstv %s994
        %v996 = vmul.f32 %v995, %v937
        %v997 = vadd.f32 %v993, %v996
        %s998 = sld [smem:[#allocation7 + $0x42]]
        %v999 = vstv %s998
        %v1000 = vmul.f32 %v999, %v940
        %v1001 = vadd.f32 %v997, %v1000
        %s1002 = sld [smem:[#allocation7 + $0x43]]
        %v1003 = vstv %s1002
        %v1004 = vmul.f32 %v1003, %v918
        %v1005 = vadd.f32 %v1001, %v1004
        %s1006 = sld [smem:[#allocation7 + $0x44]]
        %v1007 = vstv %s1006
        %v1008 = vmul.f32 %v1007, %v943
        %v1009 = vadd.f32 %v1005, %v1008
        %s1010 = sld [smem:[#allocation7 + $0x45]]
        %v1011 = vstv %s1010
        %v1012 = vmul.f32 %v1011, %v946
        %v1013 = vadd.f32 %v1009, %v1012
        %s1014 = sld [smem:[#allocation7 + $0x46]]
        %v1015 = vstv %s1014
        %v1016 = vmul.f32 %v1015, %v931
        %v1017 = vadd.f32 %v1013, %v1016
        %s1018 = sld [smem:[#allocation7 + $0x47]]
        %v1019 = vstv %s1018
        %v1020 = vmul.f32 %v1019, %v949
        %v1021 = vadd.f32 %v1017, %v1020
        %s1022 = sld [smem:[#allocation7 + $0x63]]
        %v1023 = vstv %s1022
        %v1024 = vmul.f32 %v1023, %v934
        %v1025 = vadd.f32 %v844, %v1024
        %s1026 = sld [smem:[#allocation7 + $0x64]]
        %v1027 = vstv %s1026
        %v1028 = vmul.f32 %v1027, %v926
        %v1029 = vadd.f32 %v1025, %v1028
        %s1030 = sld [smem:[#allocation7 + $0x65]]
        %v1031 = vstv %s1030
        %v1032 = vmul.f32 %v1031, %v937
        %v1033 = vadd.f32 %v1029, %v1032
        %s1034 = sld [smem:[#allocation7 + $0x66]]
        %v1035 = vstv %s1034
        %v1036 = vmul.f32 %v1035, %v940
        %v1037 = vadd.f32 %v1033, %v1036
        %s1038 = sld [smem:[#allocation7 + $0x67]]
        %v1039 = vstv %s1038
        %v1040 = vmul.f32 %v1039, %v918
        %v1041 = vadd.f32 %v1037, %v1040
        %s1042 = sld [smem:[#allocation7 + $0x68]]
        %v1043 = vstv %s1042
        %v1044 = vmul.f32 %v1043, %v943
        %v1045 = vadd.f32 %v1041, %v1044
        %s1046 = sld [smem:[#allocation7 + $0x69]]
        %v1047 = vstv %s1046
        %v1048 = vmul.f32 %v1047, %v946
        %v1049 = vadd.f32 %v1045, %v1048
        %s1050 = sld [smem:[#allocation7 + $0x6a]]
        %v1051 = vstv %s1050
        %v1052 = vmul.f32 %v1051, %v931
        %v1053 = vadd.f32 %v1049, %v1052
        %s1054 = sld [smem:[#allocation7 + $0x6b]]
        %v1055 = vstv %s1054
        %v1056 = vmul.f32 %v1055, %v949
        %v1057 = vadd.f32 %v1053, %v1056
        %s1058 = sld [smem:[#allocation7 + $0x87]]
        %v1059 = vstv %s1058
        %v1060 = vmul.f32 %v1059, %v934
        %v1061 = vadd.f32 %v880, %v1060
        %s1062 = sld [smem:[#allocation7 + $0x88]]
        %v1063 = vstv %s1062
        %v1064 = vmul.f32 %v1063, %v926
        %v1065 = vadd.f32 %v1061, %v1064
        %s1066 = sld [smem:[#allocation7 + $0x89]]
        %v1067 = vstv %s1066
        %v1068 = vmul.f32 %v1067, %v937
        %v1069 = vadd.f32 %v1065, %v1068
        %s1070 = sld [smem:[#allocation7 + $0x8a]]
        %v1071 = vstv %s1070
        %v1072 = vmul.f32 %v1071, %v940
        %v1073 = vadd.f32 %v1069, %v1072
        %s1074 = sld [smem:[#allocation7 + $0x8b]]
        %v1075 = vstv %s1074
        %v1076 = vmul.f32 %v1075, %v918
        %v1077 = vadd.f32 %v1073, %v1076
        %s1078 = sld [smem:[#allocation7 + $0x8c]]
        %v1079 = vstv %s1078
        %v1080 = vmul.f32 %v1079, %v943
        %v1081 = vadd.f32 %v1077, %v1080
        %s1082 = sld [smem:[#allocation7 + $0x8d]]
        %v1083 = vstv %s1082
        %v1084 = vmul.f32 %v1083, %v946
        %v1085 = vadd.f32 %v1081, %v1084
        %s1086 = sld [smem:[#allocation7 + $0x8e]]
        %v1087 = vstv %s1086
        %v1088 = vmul.f32 %v1087, %v931
        %v1089 = vadd.f32 %v1085, %v1088
        %s1090 = sld [smem:[#allocation7 + $0x8f]]
        %v1091 = vstv %s1090
        %v1092 = vmul.f32 %v1091, %v949
        %v1093 = vadd.f32 %v1089, %v1092
        %s1094 = sld [smem:[#allocation7 + $0xab]]
        %v1095 = vstv %s1094
        %v1096 = vmul.f32 %v1095, %v934
        %v1097 = vadd.f32 %v916, %v1096
        %s1098 = sld [smem:[#allocation7 + $0xac]]
        %v1099 = vstv %s1098
        %v1100 = vmul.f32 %v1099, %v926
        %v1101 = vadd.f32 %v1097, %v1100
        %s1102 = sld [smem:[#allocation7 + $0xad]]
        %v1103 = vstv %s1102
        %v1104 = vmul.f32 %v1103, %v937
        %v1105 = vadd.f32 %v1101, %v1104
        %s1106 = sld [smem:[#allocation7 + $0xae]]
        %v1107 = vstv %s1106
        %v1108 = vmul.f32 %v1107, %v940
        %v1109 = vadd.f32 %v1105, %v1108
        %s1110 = sld [smem:[#allocation7 + $0xaf]]
        %v1111 = vstv %s1110
        %v1112 = vmul.f32 %v1111, %v918
        %v1113 = vadd.f32 %v1109, %v1112
        %s1114 = sld [smem:[#allocation7 + $0xb0]]
        %v1115 = vstv %s1114
        %v1116 = vmul.f32 %v1115, %v943
        %v1117 = vadd.f32 %v1113, %v1116
        %s1118 = sld [smem:[#allocation7 + $0xb1]]
        %v1119 = vstv %s1118
        %v1120 = vmul.f32 %v1119, %v946
        %v1121 = vadd.f32 %v1117, %v1120
        %s1122 = sld [smem:[#allocation7 + $0xb2]]
        %v1123 = vstv %s1122
        %v1124 = vmul.f32 %v1123, %v931
        %v1125 = vadd.f32 %v1121, %v1124
        %s1126 = sld [smem:[#allocation7 + $0xb3]]
        %v1127 = vstv %s1126
        %v1128 = vmul.f32 %v1127, %v949
        %v1129 = vadd.f32 %v1125, %v1128
        %1130 = vst [vmem:[%s242] sm:$0x3] %v985
        %s1131 = scalar_lea.vmem %s242, 2 [#allocation10]
        %1132 = vst [vmem:[%s1131] sm:$0x3] %v1021
        %s1133 = scalar_lea.vmem %s242, 4 [#allocation10]
        %1134 = vst [vmem:[%s1133] sm:$0x3] %v1057
        %s1135 = scalar_lea.vmem %s242, 6 [#allocation10]
        %1136 = vst [vmem:[%s1135] sm:$0x3] %v1093
        %1137 = vst [vmem:[%s249] sm:$0x3] %v1129
        %s1138 = sand.u32 %s103, 1
        %s1139 = scalar_lea.sflag [#allocation5], %s1138
        %s1140 = sand.u32 %s103, 1
        %s1141 = smul.addr %s1140, 8
        %s1142 = scalar_lea.vmem [#allocation10], %s1141
        %s1143 = sand.u32 %s129, 1
        %s1144 = scalar_lea.sflag [#allocation12], %s1143
        %s1145 = sand.u32 %s129, 1
        %s1146 = smul.addr %s1145, 2
        %s1147 = scalar_lea.vmem [#allocation11], %s1146
        // Predicated region
        $region45: #{fcos_head_forward.1} parent=31 // pred_check
          %p1148 = pneg %p113
        $region46: #{fcos_head_forward.1} parent=31 // pred_check_branch
          %1150 = sbr.rel (%p1148) target = $region48
        $region47: #{fcos_head_forward.1} parent=31 // pred_region
          %s1152 = ssub.s32 128, 128
          %1153 = vsyncadd %s1139, %s1152
          %s1154 = smul.addr %s27, 4
          %s1155 = smul.addr %s1154, 32
          %s1156 = scalar_lea.hbm %s3, %s1155
          %s1157 = sshll.u32 %s1142, 4
          %s1158 = int_to_ptr.vmem [resolvable:$true] %s1157
          %1163 = dma.vmem_to_hbm [thread:$0]  %s1158, 128, %s1156, %s1139, 32, 32, 2
        $region48: #{fcos_head_forward.1} parent=31 // pred_fallthru
          _
        // Predicated region
        $region49: #{fcos_head_forward.1} parent=31 // pred_check
          %p1164 = pneg %p139
        $region50: #{fcos_head_forward.1} parent=31 // pred_check_branch
          %1166 = sbr.rel (%p1164) target = $region52
        $region51: #{fcos_head_forward.1} parent=31 // pred_region
          %s1168 = ssub.s32 32, 32
          %1169 = vsyncadd %s1144, %s1168
          %s1170 = smul.addr %s27, 32
          %s1171 = scalar_lea.hbm %s4, %s1170
          %s1173 = sshll.u32 %s1147, 4
          %s1174 = int_to_ptr.vmem [resolvable:$true] %s1173
          %1176 = dma.vmem_to_hbm [thread:$0]  %s1174, 32, %s1171, %s1144
        $region52: #{fcos_head_forward.1} parent=31 // pred_fallthru
          _
      $region32: #{fcos_head_forward.1} parent=5 // pred_fallthru
        _
      %p1177 = scmp.le.s32.totalorder 2, %s22
      // Predicated region
      $region53: #{fcos_head_forward.1} parent=5 // pred_check
        %p1178 = pneg %p1177
      $region54: #{fcos_head_forward.1} parent=5 // pred_check_branch
        %1180 = sbr.rel (%p1178) target = $region56
      $region55: #{fcos_head_forward.1} parent=5 // pred_region
        %s1181 = ssub.s32 %s22, 2
        // Predicated region
        $region57: #{fcos_head_forward.1} parent=55 // pred_check
          %p1182 = pneg %p119
        $region58: #{fcos_head_forward.1} parent=55 // pred_check_branch
          %1184 = sbr.rel (%p1182) target = $region60
        $region59: #{fcos_head_forward.1} parent=55 // pred_region
          %s1185 = sand.u32 %s104, 1
          %s1186 = scalar_lea.sflag [#allocation5], %s1185
          %s1187 = sand.u32 %s104, 1
          %s1188 = smul.addr %s1187, 8
          %s1189 = scalar_lea.vmem [#allocation10], %s1188
          %1190 = dma.done %s1186, 128
        $region60: #{fcos_head_forward.1} parent=55 // pred_fallthru
          _
        // Predicated region
        $region61: #{fcos_head_forward.1} parent=55 // pred_check
          %p1191 = pneg %p145
        $region62: #{fcos_head_forward.1} parent=55 // pred_check_branch
          %1193 = sbr.rel (%p1191) target = $region64
        $region63: #{fcos_head_forward.1} parent=55 // pred_region
          %s1194 = sand.u32 %s130, 1
          %s1195 = scalar_lea.sflag [#allocation12], %s1194
          %s1196 = sand.u32 %s130, 1
          %s1197 = smul.addr %s1196, 2
          %s1198 = scalar_lea.vmem [#allocation11], %s1197
          %1199 = dma.done %s1195, 32
        $region64: #{fcos_head_forward.1} parent=55 // pred_fallthru
          _
      $region56: #{fcos_head_forward.1} parent=5 // pred_fallthru
        _
    $region6: #{fcos_head_forward.1} parent=1 // loop_footer
      %s26 = sadd.s32 1, %s22
    $region7: #{fcos_head_forward.1} parent=1 // loop_footer_branch
      %21 = sbr.rel target = $region3
    $region8: #{fcos_head_forward.1} parent=1 // loop_exit
      _
    %1200 = vsyncpa [#allocation4], 1
    %s1201 = scalar_lea.sflag [#allocation4], 1
    %1202 = vsyncpa %s1201, 1
    %1203 = vsyncpa [#allocation5], 1
    %s1204 = scalar_lea.sflag [#allocation5], 1
    %1205 = vsyncpa %s1204, 1
    %1206 = vsyncpa [#allocation12], 1
    %s1207 = scalar_lea.sflag [#allocation12], 1
    %1208 = vsyncpa %s1207, 1
    %1209 = vsyncpa [#allocation6], 1
    %s1210 = scalar_lea.sflag [#allocation6], 1
    %1211 = vsyncpa %s1210, 1
    %1212 = vsyncpa [#allocation9], 1

</llo_original>
